<compile_context>
chip_gen: v7x
topology: tpu7x:2x2x1
jax: 0.10.0
libtpu: 0.0.40
codegen_flags: <defaults>
</compile_context>

<pallas_src>
import jax
import jax.numpy as jnp
from jax import lax
from jax.experimental import pallas as pl
from jax.experimental.pallas import tpu as pltpu

IN_FEATURES = 12 * 8 * 8  # 768
H1, H2, H3, OUT = 64, 32, 16, 1
DEFAULT_BATCH_TILE = 256   # >=256 per perf review; must be a multiple of 16
ROW_CHUNK = 128            # rows of the tile processed per inner step


def _make_kernel(batch_tile, chunk):
    n_chunks = batch_tile // chunk

    def kernel(x_ref,
               w1_ref, b1_ref,
               w2_ref, b2_ref,
               w3_ref, b3_ref,
               w4t_ref, b4_ref,
               o_ref):
        # Weights/biases are tiny (<200 KiB) and fully VMEM-resident.
        w1 = w1_ref[...]            # (768, 64) bf16
        w2 = w2_ref[...]            # (64, 32)  bf16
        w3 = w3_ref[...]            # (32, 16)  bf16
        w4t = w4t_ref[...]          # (1, 16)   f32
        b1 = b1_ref[...]            # (1, 64)   f32
        b2 = b2_ref[...]            # (1, 32)   f32
        b3 = b3_ref[...]            # (1, 16)   f32
        b4 = b4_ref[...]            # (1, 1)    f32

        # Process the batch tile in static row sub-chunks: DMA block stays
        # large (per-step overhead amortized) while live vreg ranges stay small.
        for c in range(n_chunks):
            r = c * chunk                                        # static offset
            x = x_ref[r:r + chunk, :]                            # (chunk, 768) bf16

            # fc1 + relu : (chunk, 768) @ (768, 64), f32 accumulation
            h = jnp.dot(x, w1, preferred_element_type=jnp.float32) + b1
            h = jnp.maximum(h, 0.0).astype(jnp.bfloat16)

            # fc2 + relu : (chunk, 64) @ (64, 32)
            h = jnp.dot(h, w2, preferred_element_type=jnp.float32) + b2
            h = jnp.maximum(h, 0.0).astype(jnp.bfloat16)

            # fc3 + relu : (chunk, 32) @ (32, 16)
            h = jnp.dot(h, w3, preferred_element_type=jnp.float32) + b3
            h = jnp.maximum(h, 0.0)                              # (chunk, 16) f32

            # fc4 : contract the 16-dim of w4^T (1,16) with the 16-dim of
            # h (chunk,16) -> (1, chunk).  Batch lands on lanes, so the output
            # store below is lane-dense (no masked vst, no transpose).
            y = lax.dot_general(
                w4t, h,
                dimension_numbers=(((1,), (1,)), ((), ())),
                preferred_element_type=jnp.float32) + b4          # (1, chunk)

            o_ref[0, :, r:r + chunk] = y

    return kernel


def biggest_chess_net(x, params, *, batch_tile=DEFAULT_BATCH_TILE):
    """x: (B, 12, 8, 8) float. Returns (B, 1) float32."""
    assert batch_tile % 16 == 0, "batch_tile must be a multiple of 16 (bf16 sublanes)"
    B = x.shape[0]
    num_tiles = pl.cdiv(B, batch_tile)
    padded_b = num_tiles * batch_tile

    # Glue (plain JAX): flatten NCHW -> (B, 768) row-major (== torch Flatten),
    # pad ragged batches to a tile multiple, cast the bandwidth-dominant input
    # to bf16 (kernel accumulates in f32 on the MXU).
    x_flat = x.reshape(B, IN_FEATURES)
    if padded_b != B:
        x_flat = jnp.pad(x_flat, ((0, padded_b - B), (0, 0)))
    x_bf16 = x_flat.astype(jnp.bfloat16)

    w1, b1, w2, b2, w3, b3, w4, b4 = params
    w1b = w1.astype(jnp.bfloat16)
    w2b = w2.astype(jnp.bfloat16)
    w3b = w3.astype(jnp.bfloat16)
    w4t = w4.T.astype(jnp.float32)                 # (1, 16), used lane-major in fc4
    b4r = b4.reshape(1, 1).astype(jnp.float32)

    chunk = ROW_CHUNK if batch_tile % ROW_CHUNK == 0 else batch_tile

    def full_spec(arr):
        # Constant-index full blocks: fetched once, resident across the grid.
        return pl.BlockSpec(arr.shape, lambda i: (0, 0))

    out3d = pl.pallas_call(
        _make_kernel(batch_tile, chunk),
        out_shape=jax.ShapeDtypeStruct((num_tiles, 1, batch_tile), jnp.float32),
        grid_spec=pltpu.PrefetchScalarGridSpec(
            num_scalar_prefetch=0,
            grid=(num_tiles,),
            in_specs=[
                pl.BlockSpec((batch_tile, IN_FEATURES), lambda i: (i, 0)),
                full_spec(w1b), full_spec(b1),
                full_spec(w2b), full_spec(b2),
                full_spec(w3b), full_spec(b3),
                full_spec(w4t), full_spec(b4r),
            ],
            # Lane-dense output block: batch along the 128-lane axis.
            out_specs=pl.BlockSpec((1, 1, batch_tile), lambda i: (i, 0, 0)),
        ),
        compiler_params=pltpu.CompilerParams(
            # "parallel" lets the batch-tile grid shard across v7x's 2 TCs.
            dimension_semantics=("parallel",),
            # VMEM at batch_tile=256 is ~1.5 MiB double-buffered; only set
            # vmem_limit_bytes if batch_tile is pushed past ~2048 (v5e 16 MiB).
        ),
    )(x_bf16, w1b, b1, w2b, b2, w3b, b3, w4t, b4r)

    # (num_tiles, 1, batch_tile) -> (padded_B, 1) -> strip batch padding.
    return out3d.reshape(padded_b, 1)[:B]


def init_params(key):
    """Deterministic synthetic parameters matching the module's layer shapes.
    Weights stored as (in, out); biases as (1, out) for 2D TPU layout."""
    keys = jax.random.split(key, 8)

    def lin(kw, kb, fan_in, fan_out):
        bound = 1.0 / jnp.sqrt(fan_in)
        w = jax.random.uniform(kw, (fan_in, fan_out), jnp.float32, -bound, bound)
        b = jax.random.uniform(kb, (1, fan_out), jnp.float32, -bound, bound)
        return w, b

    w1, b1 = lin(keys[0], keys[1], IN_FEATURES, H1)
    w2, b2 = lin(keys[2], keys[3], H1, H2)
    w3, b3 = lin(keys[4], keys[5], H2, H3)
    w4, b4 = lin(keys[6], keys[7], H3, OUT)
    return (w1, b1, w2, b2, w3, b3, w4, b4)


def reference_forward(x, params):
    w1, b1, w2, b2, w3, b3, w4, b4 = params
    h = x.reshape(x.shape[0], -1)
    h = jnp.maximum(h @ w1 + b1, 0.0)
    h = jnp.maximum(h @ w2 + b2, 0.0)
    h = jnp.maximum(h @ w3 + b3, 0.0)
    return h @ w4 + b4


if __name__ == "__main__":
    key = jax.random.PRNGKey(0)
    k_param, k_x = jax.random.split(key)
    params = init_params(k_param)

    # chess board tensor: small ragged batch, 12 piece planes, 8x8 board
    B = 40
    x = jax.random.uniform(k_x, (B, 12, 8, 8), jnp.float32)

    ref = reference_forward(x, params)  # f32 reference

    # Default tile (256): batch padded to one tile, grid = 1.
    out = jax.block_until_ready(biggest_chess_net(x, params))
    assert out.shape == (B, 1), out.shape
    assert jnp.allclose(out, ref, atol=5e-2, rtol=5e-2), (
        f"max abs err = {jnp.max(jnp.abs(out - ref))}")

    # Small tile (16): exercises a multi-step grid (3 tiles) + batch padding.
    out2 = jax.block_until_ready(biggest_chess_net(x, params, batch_tile=16))
    assert out2.shape == (B, 1), out2.shape
    assert jnp.allclose(out2, ref, atol=5e-2, rtol=5e-2), (
        f"max abs err = {jnp.max(jnp.abs(out2 - ref))}")

    print("KERNEL_OK")
</pallas_src>

<mosaic_0001>
module attributes {stable_mosaic.version = 11 : i64} {
  func.func @kernel(%arg0: i32, %arg1: memref<256x768xbf16, #tpu.memory_space<vmem>>, %arg2: memref<768x64xbf16, #tpu.memory_space<vmem>>, %arg3: memref<1x64xf32, #tpu.memory_space<vmem>>, %arg4: memref<64x32xbf16, #tpu.memory_space<vmem>>, %arg5: memref<1x32xf32, #tpu.memory_space<vmem>>, %arg6: memref<32x16xbf16, #tpu.memory_space<vmem>>, %arg7: memref<1x16xf32, #tpu.memory_space<vmem>>, %arg8: memref<1x16xf32, #tpu.memory_space<vmem>>, %arg9: memref<1x1xf32, #tpu.memory_space<vmem>>, %arg10: memref<1x1x256xf32, #tpu.memory_space<vmem>>) attributes {dimension_semantics = [#tpu.dimension_semantics<parallel>], iteration_bounds = array<i64: 1>, scalar_prefetch = 0 : i64, scratch_operands = 0 : i64, tpu.core_type = #tpu.core_type<tc>, window_params = [{transform_indices = @transform_0, window_bounds = array<i64: 256, 768>}, {pipeline_mode = #tpu.pipeline_mode<synchronous>, transform_indices = @transform_1, window_bounds = array<i64: 768, 64>}, {pipeline_mode = #tpu.pipeline_mode<synchronous>, transform_indices = @transform_2, window_bounds = array<i64: 1, 64>}, {pipeline_mode = #tpu.pipeline_mode<synchronous>, transform_indices = @transform_3, window_bounds = array<i64: 64, 32>}, {pipeline_mode = #tpu.pipeline_mode<synchronous>, transform_indices = @transform_4, window_bounds = array<i64: 1, 32>}, {pipeline_mode = #tpu.pipeline_mode<synchronous>, transform_indices = @transform_5, window_bounds = array<i64: 32, 16>}, {pipeline_mode = #tpu.pipeline_mode<synchronous>, transform_indices = @transform_6, window_bounds = array<i64: 1, 16>}, {pipeline_mode = #tpu.pipeline_mode<synchronous>, transform_indices = @transform_7, window_bounds = array<i64: 1, 16>}, {pipeline_mode = #tpu.pipeline_mode<synchronous>, transform_indices = @transform_8, window_bounds = array<i64: 1, 1>}, {transform_indices = @transform_9, window_bounds = array<i64: 1, 1, 256>}]} {
    %c0 = arith.constant 0 : index
    %c0_0 = arith.constant 0 : index
    %0 = vector.load %arg2[%c0, %c0_0] : memref<768x64xbf16, #tpu.memory_space<vmem>>, vector<768x64xbf16>
    %c0_1 = arith.constant 0 : index
    %c0_2 = arith.constant 0 : index
    %1 = vector.load %arg4[%c0_1, %c0_2] : memref<64x32xbf16, #tpu.memory_space<vmem>>, vector<64x32xbf16>
    %c0_3 = arith.constant 0 : index
    %c0_4 = arith.constant 0 : index
    %2 = vector.load %arg6[%c0_3, %c0_4] : memref<32x16xbf16, #tpu.memory_space<vmem>>, vector<32x16xbf16>
    %c0_5 = arith.constant 0 : index
    %c0_6 = arith.constant 0 : index
    %3 = vector.load %arg8[%c0_5, %c0_6] : memref<1x16xf32, #tpu.memory_space<vmem>>, vector<1x16xf32>
    %c0_7 = arith.constant 0 : index
    %c0_8 = arith.constant 0 : index
    %4 = vector.load %arg3[%c0_7, %c0_8] : memref<1x64xf32, #tpu.memory_space<vmem>>, vector<1x64xf32>
    %c0_9 = arith.constant 0 : index
    %c0_10 = arith.constant 0 : index
    %5 = vector.load %arg5[%c0_9, %c0_10] : memref<1x32xf32, #tpu.memory_space<vmem>>, vector<1x32xf32>
    %c0_11 = arith.constant 0 : index
    %c0_12 = arith.constant 0 : index
    %6 = vector.load %arg7[%c0_11, %c0_12] : memref<1x16xf32, #tpu.memory_space<vmem>>, vector<1x16xf32>
    %c0_13 = arith.constant 0 : index
    %c0_14 = arith.constant 0 : index
    %7 = vector.load %arg9[%c0_13, %c0_14] : memref<1x1xf32, #tpu.memory_space<vmem>>, vector<1x1xf32>
    %c0_15 = arith.constant 0 : index
    %c0_16 = arith.constant 0 : index
    %8 = vector.load %arg1[%c0_15, %c0_16] : memref<256x768xbf16, #tpu.memory_space<vmem>>, vector<128x768xbf16>
    %cst = arith.constant dense<0.000000e+00> : vector<128x64xf32>
    %9 = tpu.matmul %8, %0, %cst {dimension_numbers = #tpu.dot_dimension_numbers<[1], [0], [0], [1], [0, 0, 1, 1], [], []>} : vector<128x768xbf16>, vector<768x64xbf16>, vector<128x64xf32> -> vector<128x64xf32>
    %10 = vector.broadcast %4 : vector<1x64xf32> to vector<128x64xf32>
    %11 = arith.addf %9, %10 : vector<128x64xf32>
    %cst_17 = arith.constant 0.000000e+00 : f32
    %12 = vector.broadcast %cst_17 : f32 to vector<128x64xf32>
    %13 = arith.maximumf %11, %12 : vector<128x64xf32>
    %14 = arith.truncf %13 : vector<128x64xf32> to vector<128x64xbf16>
    %cst_18 = arith.constant dense<0.000000e+00> : vector<128x32xf32>
    %15 = tpu.matmul %14, %1, %cst_18 {dimension_numbers = #tpu.dot_dimension_numbers<[1], [0], [0], [1], [0, 0, 1, 1], [], []>} : vector<128x64xbf16>, vector<64x32xbf16>, vector<128x32xf32> -> vector<128x32xf32>
    %16 = vector.broadcast %5 : vector<1x32xf32> to vector<128x32xf32>
    %17 = arith.addf %15, %16 : vector<128x32xf32>
    %cst_19 = arith.constant 0.000000e+00 : f32
    %18 = vector.broadcast %cst_19 : f32 to vector<128x32xf32>
    %19 = arith.maximumf %17, %18 : vector<128x32xf32>
    %20 = arith.truncf %19 : vector<128x32xf32> to vector<128x32xbf16>
    %cst_20 = arith.constant dense<0.000000e+00> : vector<128x16xf32>
    %21 = tpu.matmul %20, %2, %cst_20 {dimension_numbers = #tpu.dot_dimension_numbers<[1], [0], [0], [1], [0, 0, 1, 1], [], []>} : vector<128x32xbf16>, vector<32x16xbf16>, vector<128x16xf32> -> vector<128x16xf32>
    %22 = vector.broadcast %6 : vector<1x16xf32> to vector<128x16xf32>
    %23 = arith.addf %21, %22 : vector<128x16xf32>
    %cst_21 = arith.constant 0.000000e+00 : f32
    %24 = vector.broadcast %cst_21 : f32 to vector<128x16xf32>
    %25 = arith.maximumf %23, %24 : vector<128x16xf32>
    %cst_22 = arith.constant dense<0.000000e+00> : vector<1x128xf32>
    %26 = tpu.matmul %3, %25, %cst_22 {dimension_numbers = #tpu.dot_dimension_numbers<[1], [1], [0], [0], [0, 0, 1, 0], [], []>} : vector<1x16xf32>, vector<128x16xf32>, vector<1x128xf32> -> vector<1x128xf32>
    %27 = vector.broadcast %7 : vector<1x1xf32> to vector<1x128xf32>
    %28 = arith.addf %26, %27 : vector<1x128xf32>
    %c0_23 = arith.constant 0 : index
    %c0_24 = arith.constant 0 : index
    %c0_25 = arith.constant 0 : index
    %29 = vector.load %arg10[%c0_23, %c0_24, %c0_25] : memref<1x1x256xf32, #tpu.memory_space<vmem>>, vector<1x1x128xf32>
    %30 = vector.shape_cast %29 : vector<1x1x128xf32> to vector<1x128xf32>
    %31 = vector.shape_cast %28 : vector<1x128xf32> to vector<1x1x128xf32>
    tpu.vector_store %arg10[%c0_23, %c0_24, %c0_25], %31 {strides = array<i32>} : memref<1x1x256xf32, #tpu.memory_space<vmem>>, vector<1x1x128xf32>,
    %c128 = arith.constant 128 : index
    %c0_26 = arith.constant 0 : index
    %32 = vector.load %arg1[%c128, %c0_26] : memref<256x768xbf16, #tpu.memory_space<vmem>>, vector<128x768xbf16>
    %cst_27 = arith.constant dense<0.000000e+00> : vector<128x64xf32>
    %33 = tpu.matmul %32, %0, %cst_27 {dimension_numbers = #tpu.dot_dimension_numbers<[1], [0], [0], [1], [0, 0, 1, 1], [], []>} : vector<128x768xbf16>, vector<768x64xbf16>, vector<128x64xf32> -> vector<128x64xf32>
    %34 = vector.broadcast %4 : vector<1x64xf32> to vector<128x64xf32>
    %35 = arith.addf %33, %34 : vector<128x64xf32>
    %cst_28 = arith.constant 0.000000e+00 : f32
    %36 = vector.broadcast %cst_28 : f32 to vector<128x64xf32>
    %37 = arith.maximumf %35, %36 : vector<128x64xf32>
    %38 = arith.truncf %37 : vector<128x64xf32> to vector<128x64xbf16>
    %cst_29 = arith.constant dense<0.000000e+00> : vector<128x32xf32>
    %39 = tpu.matmul %38, %1, %cst_29 {dimension_numbers = #tpu.dot_dimension_numbers<[1], [0], [0], [1], [0, 0, 1, 1], [], []>} : vector<128x64xbf16>, vector<64x32xbf16>, vector<128x32xf32> -> vector<128x32xf32>
    %40 = vector.broadcast %5 : vector<1x32xf32> to vector<128x32xf32>
    %41 = arith.addf %39, %40 : vector<128x32xf32>
    %cst_30 = arith.constant 0.000000e+00 : f32
    %42 = vector.broadcast %cst_30 : f32 to vector<128x32xf32>
    %43 = arith.maximumf %41, %42 : vector<128x32xf32>
    %44 = arith.truncf %43 : vector<128x32xf32> to vector<128x32xbf16>
    %cst_31 = arith.constant dense<0.000000e+00> : vector<128x16xf32>
    %45 = tpu.matmul %44, %2, %cst_31 {dimension_numbers = #tpu.dot_dimension_numbers<[1], [0], [0], [1], [0, 0, 1, 1], [], []>} : vector<128x32xbf16>, vector<32x16xbf16>, vector<128x16xf32> -> vector<128x16xf32>
    %46 = vector.broadcast %6 : vector<1x16xf32> to vector<128x16xf32>
    %47 = arith.addf %45, %46 : vector<128x16xf32>
    %cst_32 = arith.constant 0.000000e+00 : f32
    %48 = vector.broadcast %cst_32 : f32 to vector<128x16xf32>
    %49 = arith.maximumf %47, %48 : vector<128x16xf32>
    %cst_33 = arith.constant dense<0.000000e+00> : vector<1x128xf32>
    %50 = tpu.matmul %3, %49, %cst_33 {dimension_numbers = #tpu.dot_dimension_numbers<[1], [1], [0], [0], [0, 0, 1, 0], [], []>} : vector<1x16xf32>, vector<128x16xf32>, vector<1x128xf32> -> vector<1x128xf32>
    %51 = vector.broadcast %7 : vector<1x1xf32> to vector<1x128xf32>
    %52 = arith.addf %50, %51 : vector<1x128xf32>
    %c0_34 = arith.constant 0 : index
    %c0_35 = arith.constant 0 : index
    %c128_36 = arith.constant 128 : index
    %53 = vector.load %arg10[%c0_34, %c0_35, %c128_36] : memref<1x1x256xf32, #tpu.memory_space<vmem>>, vector<1x1x128xf32>
    %54 = vector.shape_cast %53 : vector<1x1x128xf32> to vector<1x128xf32>
    %55 = vector.shape_cast %52 : vector<1x128xf32> to vector<1x1x128xf32>
    tpu.vector_store %arg10[%c0_34, %c0_35, %c128_36], %55 {strides = array<i32>} : memref<1x1x256xf32, #tpu.memory_space<vmem>>, vector<1x1x128xf32>,
    return
  }
  func.func @transform_0(%arg0: i32) -> (i32, i32) {
    %c0_i32 = arith.constant 0 : i32
    %c0_i32_0 = arith.constant 0 : i32
    return %arg0, %c0_i32 : i32, i32
  }
  func.func @transform_1(%arg0: i32) -> (i32, i32) {
    %c0_i32 = arith.constant 0 : i32
    %c0_i32_0 = arith.constant 0 : i32
    %c0_i32_1 = arith.constant 0 : i32
    return %c0_i32, %c0_i32_0 : i32, i32
  }
  func.func @transform_2(%arg0: i32) -> (i32, i32) {
    %c0_i32 = arith.constant 0 : i32
    %c0_i32_0 = arith.constant 0 : i32
    %c0_i32_1 = arith.constant 0 : i32
    return %c0_i32, %c0_i32_0 : i32, i32
  }
  func.func @transform_3(%arg0: i32) -> (i32, i32) {
    %c0_i32 = arith.constant 0 : i32
    %c0_i32_0 = arith.constant 0 : i32
    %c0_i32_1 = arith.constant 0 : i32
    return %c0_i32, %c0_i32_0 : i32, i32
  }
  func.func @transform_4(%arg0: i32) -> (i32, i32) {
    %c0_i32 = arith.constant 0 : i32
    %c0_i32_0 = arith.constant 0 : i32
    %c0_i32_1 = arith.constant 0 : i32
    return %c0_i32, %c0_i32_0 : i32, i32
  }
  func.func @transform_5(%arg0: i32) -> (i32, i32) {
    %c0_i32 = arith.constant 0 : i32
    %c0_i32_0 = arith.constant 0 : i32
    %c0_i32_1 = arith.constant 0 : i32
    return %c0_i32, %c0_i32_0 : i32, i32
  }
  func.func @transform_6(%arg0: i32) -> (i32, i32) {
    %c0_i32 = arith.constant 0 : i32
    %c0_i32_0 = arith.constant 0 : i32
    %c0_i32_1 = arith.constant 0 : i32
    return %c0_i32, %c0_i32_0 : i32, i32
  }
  func.func @transform_7(%arg0: i32) -> (i32, i32) {
    %c0_i32 = arith.constant 0 : i32
    %c0_i32_0 = arith.constant 0 : i32
    %c0_i32_1 = arith.constant 0 : i32
    return %c0_i32, %c0_i32_0 : i32, i32
  }
  func.func @transform_8(%arg0: i32) -> (i32, i32) {
    %c0_i32 = arith.constant 0 : i32
    %c0_i32_0 = arith.constant 0 : i32
    %c0_i32_1 = arith.constant 0 : i32
    return %c0_i32, %c0_i32_0 : i32, i32
  }
  func.func @transform_9(%arg0: i32) -> (i32, i32, i32) {
    %c0_i32 = arith.constant 0 : i32
    %c0_i32_0 = arith.constant 0 : i32
    %c0_i32_1 = arith.constant 0 : i32
    return %arg0, %c0_i32, %c0_i32_0 : i32, i32, i32
  }
}

</mosaic_0001>

<llo_original>
// kernel: tpu_custom_call.1
$region0: #{tpu_custom_call.1}
  #allocation0 [shape = 'u32[]', space=smem, size = 0x4, offset = 0x4, fixed_abs, tag = 'smem constant byte address 0x4 - core index']
  #allocation1 [shape = 'u32[144,128]{1,0:T(1,128)}', space=vmem, size = 0x12000, scoped, tag = 'internal scratch']
  #allocation2 [shape = 'f32[1,1]{1,0:T(1,128)S(1)}', space=vmem, size = 0x200, scoped, tag = 'scoped memory for tpu_custom_call.1']
  %s0 = inlined_call_operand.hbm [shape: bf16[256,768], index: 0, kind: input, shape index: {}]
  %s1 = inlined_call_operand.vmem [shape: bf16[768,64], index: 1, kind: input, shape index: {}]
  %s2 = inlined_call_operand.vmem [shape: f32[1,64], index: 2, kind: input, shape index: {}]
  %s3 = inlined_call_operand.vmem [shape: bf16[64,32], index: 3, kind: input, shape index: {}]
  %s4 = inlined_call_operand.vmem [shape: f32[1,32], index: 4, kind: input, shape index: {}]
  %s5 = inlined_call_operand.vmem [shape: bf16[32,16], index: 5, kind: input, shape index: {}]
  %s6 = inlined_call_operand.vmem [shape: f32[1,16], index: 6, kind: input, shape index: {}]
  %s7 = inlined_call_operand.vmem [shape: f32[1,16], index: 7, kind: input, shape index: {}]
  %s8 = inlined_call_operand.<no memory space> [shape: f32[1,1], index: 8, kind: input, shape index: {}]
  %s9 = inlined_call_operand.hbm [shape: f32[1,1,256], index: 9, kind: output, shape index: {}]
  %s10 = sld [smem:[#allocation0]]
  $region50: #{tpu_custom_call.1} parent=0
    _
  %s12 = ssub.s32 1, %s10
  %s13 = scalar_select 0, %s12, %s10
  %v14 = vstv %s8
  %15 = vst [vmem:[#allocation2] sm:$0x1] %v14
  $region1: #{tpu_custom_call.1} parent=0
    #allocation3 [shape = 'u8[393216]{0}', space=vmem, size = 0x60000, scoped, tag = 'input window, operand 0, single buffered']
    #allocation4 [shape = 's32[1]{0}', space=sflag, size = 0x4, scoped, tag = 'scoped memory for tpu_custom_call.1']
    #allocation5 [shape = 's32[1]{0}', space=sflag, size = 0x4, scoped, tag = 'scoped memory for tpu_custom_call.1']
    #allocation6 [shape = 'u8[1024]{0}', space=vmem, size = 0x400, scoped, tag = 'output window, operand 0, single buffered']
    %16 = vsyncpa [#allocation4], 0
    %17 = vsyncpa [#allocation5], 0
    // Predicated region
    $region2: #{tpu_custom_call.1} parent=1 // pred_check
      _
    $region3: #{tpu_custom_call.1} parent=1 // pred_check_branch
      %19 = sbr.rel (0) target = $region5
    $region4: #{tpu_custom_call.1} parent=1 // pred_region
      %s21 = ssub.s32 12288, 12288
      %22 = vsyncadd [#allocation4], %s21
      %s23 = sshll.u32 [#allocation3], 4
      %s24 = int_to_ptr.vmem [resolvable:$true] %s23
      %29 = dma.hbm_to_vmem [thread:$0]  %s0, 12288, %s24, [#allocation4], 384, 384, 24
    $region5: #{tpu_custom_call.1} parent=1 // pred_fallthru
      _
    // Predicated region
    $region6: #{tpu_custom_call.1} parent=1 // pred_check
      _
    $region7: #{tpu_custom_call.1} parent=1 // pred_check_branch
      %31 = sbr.rel (0) target = $region9
    $region8: #{tpu_custom_call.1} parent=1 // pred_region
      _
    $region9: #{tpu_custom_call.1} parent=1 // pred_fallthru
      _
    // Predicated region
    $region10: #{tpu_custom_call.1} parent=1 // pred_check
      _
    $region11: #{tpu_custom_call.1} parent=1 // pred_check_branch
      %33 = sbr.rel (0) target = $region13
    $region12: #{tpu_custom_call.1} parent=1 // pred_region
      _
    $region13: #{tpu_custom_call.1} parent=1 // pred_fallthru
      _
    // Predicated region
    $region14: #{tpu_custom_call.1} parent=1 // pred_check
      _
    $region15: #{tpu_custom_call.1} parent=1 // pred_check_branch
      %35 = sbr.rel (0) target = $region17
    $region16: #{tpu_custom_call.1} parent=1 // pred_region
      _
    $region17: #{tpu_custom_call.1} parent=1 // pred_fallthru
      _
    // Predicated region
    $region18: #{tpu_custom_call.1} parent=1 // pred_check
      _
    $region19: #{tpu_custom_call.1} parent=1 // pred_check_branch
      %37 = sbr.rel (0) target = $region21
    $region20: #{tpu_custom_call.1} parent=1 // pred_region
      _
    $region21: #{tpu_custom_call.1} parent=1 // pred_fallthru
      _
    // Predicated region
    $region22: #{tpu_custom_call.1} parent=1 // pred_check
      _
    $region23: #{tpu_custom_call.1} parent=1 // pred_check_branch
      %39 = sbr.rel (0) target = $region25
    $region24: #{tpu_custom_call.1} parent=1 // pred_region
      _
    $region25: #{tpu_custom_call.1} parent=1 // pred_fallthru
      _
    // Predicated region
    $region26: #{tpu_custom_call.1} parent=1 // pred_check
      _
    $region27: #{tpu_custom_call.1} parent=1 // pred_check_branch
      %41 = sbr.rel (0) target = $region29
    $region28: #{tpu_custom_call.1} parent=1 // pred_region
      _
    $region29: #{tpu_custom_call.1} parent=1 // pred_fallthru
      _
    // Predicated region
    $region30: #{tpu_custom_call.1} parent=1 // pred_check
      _
    $region31: #{tpu_custom_call.1} parent=1 // pred_check_branch
      %43 = sbr.rel (0) target = $region33
    $region32: #{tpu_custom_call.1} parent=1 // pred_region
      _
    $region33: #{tpu_custom_call.1} parent=1 // pred_fallthru
      _
    // Predicated region
    $region34: #{tpu_custom_call.1} parent=1 // pred_check
      _
    $region35: #{tpu_custom_call.1} parent=1 // pred_check_branch
      %45 = sbr.rel (0) target = $region37
    $region36: #{tpu_custom_call.1} parent=1 // pred_region
      _
    $region37: #{tpu_custom_call.1} parent=1 // pred_fallthru
      _
    // Predicated region
    $region38: #{tpu_custom_call.1} parent=1 // pred_check
      _
    $region39: #{tpu_custom_call.1} parent=1 // pred_check_branch
      %47 = sbr.rel (0) target = $region41
    $region40: #{tpu_custom_call.1} parent=1 // pred_region
      %48 = dma.done [#allocation4], 12288
    $region41: #{tpu_custom_call.1} parent=1 // pred_fallthru
      _
    %v50 = vld [vmem:[%s1] sm:$0xf]
    %v51 = vld [vmem:[%s1 + $0x4] sm:$0xf]
    %v52 = vld [vmem:[%s1 + $0x8] sm:$0xf]
    %v53 = vld [vmem:[%s1 + $0xc] sm:$0xf]
    %v54 = vld [vmem:[%s1 + $0x10] sm:$0xf]
    %v55 = vld [vmem:[%s1 + $0x14] sm:$0xf]
    %v56 = vld [vmem:[%s1 + $0x18] sm:$0xf]
    %v57 = vld [vmem:[%s1 + $0x1c] sm:$0xf]
    %v58 = vld [vmem:[%s1 + $0x20] sm:$0xf]
    %v59 = vld [vmem:[%s1 + $0x24] sm:$0xf]
    %v60 = vld [vmem:[%s1 + $0x28] sm:$0xf]
    %v61 = vld [vmem:[%s1 + $0x2c] sm:$0xf]
    %v62 = vld [vmem:[%s1 + $0x30] sm:$0xf]
    %v63 = vld [vmem:[%s1 + $0x34] sm:$0xf]
    %v64 = vld [vmem:[%s1 + $0x38] sm:$0xf]
    %v65 = vld [vmem:[%s1 + $0x3c] sm:$0xf]
    %v66 = vld [vmem:[%s1 + $0x40] sm:$0xf]
    %v67 = vld [vmem:[%s1 + $0x44] sm:$0xf]
    %v68 = vld [vmem:[%s1 + $0x48] sm:$0xf]
    %v69 = vld [vmem:[%s1 + $0x4c] sm:$0xf]
    %v70 = vld [vmem:[%s1 + $0x50] sm:$0xf]
    %v71 = vld [vmem:[%s1 + $0x54] sm:$0xf]
    %v72 = vld [vmem:[%s1 + $0x58] sm:$0xf]
    %v73 = vld [vmem:[%s1 + $0x5c] sm:$0xf]
    %v74 = vld [vmem:[%s1 + $0x60] sm:$0xf]
    %v75 = vld [vmem:[%s1 + $0x64] sm:$0xf]
    %v76 = vld [vmem:[%s1 + $0x68] sm:$0xf]
    %v77 = vld [vmem:[%s1 + $0x6c] sm:$0xf]
    %v78 = vld [vmem:[%s1 + $0x70] sm:$0xf]
    %v79 = vld [vmem:[%s1 + $0x74] sm:$0xf]
    %v80 = vld [vmem:[%s1 + $0x78] sm:$0xf]
    %v81 = vld [vmem:[%s1 + $0x7c] sm:$0xf]
    %v82 = vld [vmem:[%s1 + $0x80] sm:$0xf]
    %v83 = vld [vmem:[%s1 + $0x84] sm:$0xf]
    %v84 = vld [vmem:[%s1 + $0x88] sm:$0xf]
    %v85 = vld [vmem:[%s1 + $0x8c] sm:$0xf]
    %v86 = vld [vmem:[%s1 + $0x90] sm:$0xf]
    %v87 = vld [vmem:[%s1 + $0x94] sm:$0xf]
    %v88 = vld [vmem:[%s1 + $0x98] sm:$0xf]
    %v89 = vld [vmem:[%s1 + $0x9c] sm:$0xf]
    %v90 = vld [vmem:[%s1 + $0xa0] sm:$0xf]
    %v91 = vld [vmem:[%s1 + $0xa4] sm:$0xf]
    %v92 = vld [vmem:[%s1 + $0xa8] sm:$0xf]
    %v93 = vld [vmem:[%s1 + $0xac] sm:$0xf]
    %v94 = vld [vmem:[%s1 + $0xb0] sm:$0xf]
    %v95 = vld [vmem:[%s1 + $0xb4] sm:$0xf]
    %v96 = vld [vmem:[%s1 + $0xb8] sm:$0xf]
    %v97 = vld [vmem:[%s1 + $0xbc] sm:$0xf]
    %v98 = vld [vmem:[%s1 + $0xc0] sm:$0xf]
    %v99 = vld [vmem:[%s1 + $0xc4] sm:$0xf]
    %v100 = vld [vmem:[%s1 + $0xc8] sm:$0xf]
    %v101 = vld [vmem:[%s1 + $0xcc] sm:$0xf]
    %v102 = vld [vmem:[%s1 + $0xd0] sm:$0xf]
    %v103 = vld [vmem:[%s1 + $0xd4] sm:$0xf]
    %v104 = vld [vmem:[%s1 + $0xd8] sm:$0xf]
    %v105 = vld [vmem:[%s1 + $0xdc] sm:$0xf]
    %v106 = vld [vmem:[%s1 + $0xe0] sm:$0xf]
    %v107 = vld [vmem:[%s1 + $0xe4] sm:$0xf]
    %v108 = vld [vmem:[%s1 + $0xe8] sm:$0xf]
    %v109 = vld [vmem:[%s1 + $0xec] sm:$0xf]
    %v110 = vld [vmem:[%s1 + $0xf0] sm:$0xf]
    %v111 = vld [vmem:[%s1 + $0xf4] sm:$0xf]
    %v112 = vld [vmem:[%s1 + $0xf8] sm:$0xf]
    %v113 = vld [vmem:[%s1 + $0xfc] sm:$0xf]
    %v114 = vld [vmem:[%s1 + $0x100] sm:$0xf]
    %v115 = vld [vmem:[%s1 + $0x104] sm:$0xf]
    %v116 = vld [vmem:[%s1 + $0x108] sm:$0xf]
    %v117 = vld [vmem:[%s1 + $0x10c] sm:$0xf]
    %v118 = vld [vmem:[%s1 + $0x110] sm:$0xf]
    %v119 = vld [vmem:[%s1 + $0x114] sm:$0xf]
    %v120 = vld [vmem:[%s1 + $0x118] sm:$0xf]
    %v121 = vld [vmem:[%s1 + $0x11c] sm:$0xf]
    %v122 = vld [vmem:[%s1 + $0x120] sm:$0xf]
    %v123 = vld [vmem:[%s1 + $0x124] sm:$0xf]
    %v124 = vld [vmem:[%s1 + $0x128] sm:$0xf]
    %v125 = vld [vmem:[%s1 + $0x12c] sm:$0xf]
    %v126 = vld [vmem:[%s1 + $0x130] sm:$0xf]
    %v127 = vld [vmem:[%s1 + $0x134] sm:$0xf]
    %v128 = vld [vmem:[%s1 + $0x138] sm:$0xf]
    %v129 = vld [vmem:[%s1 + $0x13c] sm:$0xf]
    %v130 = vld [vmem:[%s1 + $0x140] sm:$0xf]
    %v131 = vld [vmem:[%s1 + $0x144] sm:$0xf]
    %v132 = vld [vmem:[%s1 + $0x148] sm:$0xf]
    %v133 = vld [vmem:[%s1 + $0x14c] sm:$0xf]
    %v134 = vld [vmem:[%s1 + $0x150] sm:$0xf]
    %v135 = vld [vmem:[%s1 + $0x154] sm:$0xf]
    %v136 = vld [vmem:[%s1 + $0x158] sm:$0xf]
    %v137 = vld [vmem:[%s1 + $0x15c] sm:$0xf]
    %v138 = vld [vmem:[%s1 + $0x160] sm:$0xf]
    %v139 = vld [vmem:[%s1 + $0x164] sm:$0xf]
    %v140 = vld [vmem:[%s1 + $0x168] sm:$0xf]
    %v141 = vld [vmem:[%s1 + $0x16c] sm:$0xf]
    %v142 = vld [vmem:[%s1 + $0x170] sm:$0xf]
    %v143 = vld [vmem:[%s1 + $0x174] sm:$0xf]
    %v144 = vld [vmem:[%s1 + $0x178] sm:$0xf]
    %v145 = vld [vmem:[%s1 + $0x17c] sm:$0xf]
    %v146 = vld [vmem:[%s3] sm:$0xf]
    %v147 = vld [vmem:[%s3 + $0x4] sm:$0xf]
    %v148 = vld [vmem:[%s3 + $0x8] sm:$0xf]
    %v149 = vld [vmem:[%s3 + $0xc] sm:$0xf]
    %v150 = vld [vmem:[%s3 + $0x10] sm:$0xf]
    %v151 = vld [vmem:[%s3 + $0x14] sm:$0xf]
    %v152 = vld [vmem:[%s3 + $0x18] sm:$0xf]
    %v153 = vld [vmem:[%s3 + $0x1c] sm:$0xf]
    %v154 = vld [vmem:[%s5] sm:$0xf]
    %v155 = vld [vmem:[%s5 + $0x4] sm:$0xf]
    %v156 = vld [vmem:[%s5 + $0x8] sm:$0xf]
    %v157 = vld [vmem:[%s5 + $0xc] sm:$0xf]
    %v158 = vld [vmem:[%s7] sm:$0x1]
    %v159 = vld [vmem:[%s2] sm:$0x1]
    %v160 = vld [vmem:[%s4] sm:$0x1]
    %v161 = vld [vmem:[%s6] sm:$0x1]
    %v162 = vld [vmem:[#allocation2] sm:$0x1]
    %v163 = vld [vmem:[#allocation3] sm:$0xff]
    %v164 = vld [vmem:[#allocation3 + $0x8] sm:$0xff]
    %v165 = vld [vmem:[#allocation3 + $0x10] sm:$0xff]
    %v166 = vld [vmem:[#allocation3 + $0x18] sm:$0xff]
    %v167 = vld [vmem:[#allocation3 + $0x20] sm:$0xff]
    %v168 = vld [vmem:[#allocation3 + $0x28] sm:$0xff]
    %v169 = vld [vmem:[#allocation3 + $0x30] sm:$0xff]
    %v170 = vld [vmem:[#allocation3 + $0x38] sm:$0xff]
    %v171 = vld [vmem:[#allocation3 + $0x40] sm:$0xff]
    %v172 = vld [vmem:[#allocation3 + $0x48] sm:$0xff]
    %v173 = vld [vmem:[#allocation3 + $0x50] sm:$0xff]
    %v174 = vld [vmem:[#allocation3 + $0x58] sm:$0xff]
    %v175 = vld [vmem:[#allocation3 + $0x60] sm:$0xff]
    %v176 = vld [vmem:[#allocation3 + $0x68] sm:$0xff]
    %v177 = vld [vmem:[#allocation3 + $0x70] sm:$0xff]
    %v178 = vld [vmem:[#allocation3 + $0x78] sm:$0xff]
    %v179 = vld [vmem:[#allocation3 + $0x80] sm:$0xff]
    %v180 = vld [vmem:[#allocation3 + $0x88] sm:$0xff]
    %v181 = vld [vmem:[#allocation3 + $0x90] sm:$0xff]
    %v182 = vld [vmem:[#allocation3 + $0x98] sm:$0xff]
    %v183 = vld [vmem:[#allocation3 + $0xa0] sm:$0xff]
    %v184 = vld [vmem:[#allocation3 + $0xa8] sm:$0xff]
    %v185 = vld [vmem:[#allocation3 + $0xb0] sm:$0xff]
    %v186 = vld [vmem:[#allocation3 + $0xb8] sm:$0xff]
    %v187 = vld [vmem:[#allocation3 + $0xc0] sm:$0xff]
    %v188 = vld [vmem:[#allocation3 + $0xc8] sm:$0xff]
    %v189 = vld [vmem:[#allocation3 + $0xd0] sm:$0xff]
    %v190 = vld [vmem:[#allocation3 + $0xd8] sm:$0xff]
    %v191 = vld [vmem:[#allocation3 + $0xe0] sm:$0xff]
    %v192 = vld [vmem:[#allocation3 + $0xe8] sm:$0xff]
    %v193 = vld [vmem:[#allocation3 + $0xf0] sm:$0xff]
    %v194 = vld [vmem:[#allocation3 + $0xf8] sm:$0xff]
    %v195 = vld [vmem:[#allocation3 + $0x100] sm:$0xff]
    %v196 = vld [vmem:[#allocation3 + $0x108] sm:$0xff]
    %v197 = vld [vmem:[#allocation3 + $0x110] sm:$0xff]
    %v198 = vld [vmem:[#allocation3 + $0x118] sm:$0xff]
    %v199 = vld [vmem:[#allocation3 + $0x120] sm:$0xff]
    %v200 = vld [vmem:[#allocation3 + $0x128] sm:$0xff]
    %v201 = vld [vmem:[#allocation3 + $0x130] sm:$0xff]
    %v202 = vld [vmem:[#allocation3 + $0x138] sm:$0xff]
    %v203 = vld [vmem:[#allocation3 + $0x140] sm:$0xff]
    %v204 = vld [vmem:[#allocation3 + $0x148] sm:$0xff]
    %v205 = vld [vmem:[#allocation3 + $0x150] sm:$0xff]
    %v206 = vld [vmem:[#allocation3 + $0x158] sm:$0xff]
    %v207 = vld [vmem:[#allocation3 + $0x160] sm:$0xff]
    %v208 = vld [vmem:[#allocation3 + $0x168] sm:$0xff]
    %v209 = vld [vmem:[#allocation3 + $0x170] sm:$0xff]
    %v210 = vld [vmem:[#allocation3 + $0x178] sm:$0xff]
    %v212 = vlaneseq
    %v213 = vshrl.u32 %v212, 7
    %v214 = vsub.s32 0, %v213
    %v215 = vrot.slane %v159, %v214
    %v265 = vunpack.c.l.b16 %v163
    %v266 = vunpack.c.h.b16 %v163
    %v267 = vunpack.c.l.b16 %v164
    %v268 = vunpack.c.h.b16 %v164
    %v269 = vunpack.c.l.b16 %v165
    %v270 = vunpack.c.h.b16 %v165
    %v271 = vunpack.c.l.b16 %v166
    %v272 = vunpack.c.h.b16 %v166
    %v273 = vunpack.c.l.b16 %v167
    %v274 = vunpack.c.h.b16 %v167
    %v275 = vunpack.c.l.b16 %v168
    %v276 = vunpack.c.h.b16 %v168
    %v277 = vunpack.c.l.b16 %v169
    %v278 = vunpack.c.h.b16 %v169
    %v279 = vunpack.c.l.b16 %v170
    %v280 = vunpack.c.h.b16 %v170
    %v281 = vunpack.c.l.b16 %v171
    %v282 = vunpack.c.h.b16 %v171
    %v283 = vunpack.c.l.b16 %v172
    %v284 = vunpack.c.h.b16 %v172
    %v285 = vunpack.c.l.b16 %v173
    %v286 = vunpack.c.h.b16 %v173
    %v287 = vunpack.c.l.b16 %v174
    %v288 = vunpack.c.h.b16 %v174
    %v289 = vunpack.c.l.b16 %v175
    %v290 = vunpack.c.h.b16 %v175
    %v291 = vunpack.c.l.b16 %v176
    %v292 = vunpack.c.h.b16 %v176
    %v293 = vunpack.c.l.b16 %v177
    %v294 = vunpack.c.h.b16 %v177
    %v295 = vunpack.c.l.b16 %v178
    %v296 = vunpack.c.h.b16 %v178
    %v297 = vunpack.c.l.b16 %v179
    %v298 = vunpack.c.h.b16 %v179
    %v299 = vunpack.c.l.b16 %v180
    %v300 = vunpack.c.h.b16 %v180
    %v301 = vunpack.c.l.b16 %v181
    %v302 = vunpack.c.h.b16 %v181
    %v303 = vunpack.c.l.b16 %v182
    %v304 = vunpack.c.h.b16 %v182
    %v305 = vunpack.c.l.b16 %v183
    %v306 = vunpack.c.h.b16 %v183
    %v307 = vunpack.c.l.b16 %v184
    %v308 = vunpack.c.h.b16 %v184
    %v309 = vunpack.c.l.b16 %v185
    %v310 = vunpack.c.h.b16 %v185
    %v311 = vunpack.c.l.b16 %v186
    %v312 = vunpack.c.h.b16 %v186
    %v313 = vunpack.c.l.b16 %v187
    %v314 = vunpack.c.h.b16 %v187
    %v315 = vunpack.c.l.b16 %v188
    %v316 = vunpack.c.h.b16 %v188
    %v317 = vunpack.c.l.b16 %v189
    %v318 = vunpack.c.h.b16 %v189
    %v319 = vunpack.c.l.b16 %v190
    %v320 = vunpack.c.h.b16 %v190
    %v321 = vunpack.c.l.b16 %v191
    %v322 = vunpack.c.h.b16 %v191
    %v323 = vunpack.c.l.b16 %v192
    %v324 = vunpack.c.h.b16 %v192
    %v325 = vunpack.c.l.b16 %v193
    %v326 = vunpack.c.h.b16 %v193
    %v327 = vunpack.c.l.b16 %v194
    %v328 = vunpack.c.h.b16 %v194
    %v329 = vunpack.c.l.b16 %v195
    %v330 = vunpack.c.h.b16 %v195
    %v331 = vunpack.c.l.b16 %v196
    %v332 = vunpack.c.h.b16 %v196
    %v333 = vunpack.c.l.b16 %v197
    %v334 = vunpack.c.h.b16 %v197
    %v335 = vunpack.c.l.b16 %v198
    %v336 = vunpack.c.h.b16 %v198
    %v337 = vunpack.c.l.b16 %v199
    %v338 = vunpack.c.h.b16 %v199
    %v339 = vunpack.c.l.b16 %v200
    %v340 = vunpack.c.h.b16 %v200
    %v341 = vunpack.c.l.b16 %v201
    %v342 = vunpack.c.h.b16 %v201
    %v343 = vunpack.c.l.b16 %v202
    %v344 = vunpack.c.h.b16 %v202
    %v345 = vunpack.c.l.b16 %v203
    %v346 = vunpack.c.h.b16 %v203
    %v347 = vunpack.c.l.b16 %v204
    %v348 = vunpack.c.h.b16 %v204
    %v349 = vunpack.c.l.b16 %v205
    %v350 = vunpack.c.h.b16 %v205
    %v351 = vunpack.c.l.b16 %v206
    %v352 = vunpack.c.h.b16 %v206
    %v353 = vunpack.c.l.b16 %v207
    %v354 = vunpack.c.h.b16 %v207
    %v355 = vunpack.c.l.b16 %v208
    %v356 = vunpack.c.h.b16 %v208
    %v357 = vunpack.c.l.b16 %v209
    %v358 = vunpack.c.h.b16 %v209
    %v359 = vunpack.c.l.b16 %v210
    %v360 = vunpack.c.h.b16 %v210
    %v361 = vpack.c.b16 %v271, %v265
    %v362 = vpack.c.b16 %v272, %v266
    %v363 = vpack.c.b16 %v273, %v267
    %v364 = vpack.c.b16 %v274, %v268
    %v365 = vpack.c.b16 %v275, %v269
    %v366 = vpack.c.b16 %v276, %v270
    %v367 = vpack.c.b16 %v283, %v277
    %v368 = vpack.c.b16 %v284, %v278
    %v369 = vpack.c.b16 %v285, %v279
    %v370 = vpack.c.b16 %v286, %v280
    %v371 = vpack.c.b16 %v287, %v281
    %v372 = vpack.c.b16 %v288, %v282
    %v373 = vpack.c.b16 %v295, %v289
    %v374 = vpack.c.b16 %v296, %v290
    %v375 = vpack.c.b16 %v297, %v291
    %v376 = vpack.c.b16 %v298, %v292
    %v377 = vpack.c.b16 %v299, %v293
    %v378 = vpack.c.b16 %v300, %v294
    %v379 = vpack.c.b16 %v307, %v301
    %v380 = vpack.c.b16 %v308, %v302
    %v381 = vpack.c.b16 %v309, %v303
    %v382 = vpack.c.b16 %v310, %v304
    %v383 = vpack.c.b16 %v311, %v305
    %v384 = vpack.c.b16 %v312, %v306
    %v385 = vpack.c.b16 %v319, %v313
    %v386 = vpack.c.b16 %v320, %v314
    %v387 = vpack.c.b16 %v321, %v315
    %v388 = vpack.c.b16 %v322, %v316
    %v389 = vpack.c.b16 %v323, %v317
    %v390 = vpack.c.b16 %v324, %v318
    %v391 = vpack.c.b16 %v331, %v325
    %v392 = vpack.c.b16 %v332, %v326
    %v393 = vpack.c.b16 %v333, %v327
    %v394 = vpack.c.b16 %v334, %v328
    %v395 = vpack.c.b16 %v335, %v329
    %v396 = vpack.c.b16 %v336, %v330
    %v397 = vpack.c.b16 %v343, %v337
    %v398 = vpack.c.b16 %v344, %v338
    %v399 = vpack.c.b16 %v345, %v339
    %v400 = vpack.c.b16 %v346, %v340
    %v401 = vpack.c.b16 %v347, %v341
    %v402 = vpack.c.b16 %v348, %v342
    %v403 = vpack.c.b16 %v355, %v349
    %v404 = vpack.c.b16 %v356, %v350
    %v405 = vpack.c.b16 %v357, %v351
    %v406 = vpack.c.b16 %v358, %v352
    %v407 = vpack.c.b16 %v359, %v353
    %v408 = vpack.c.b16 %v360, %v354
    %v553 = vunpack.c.l.b16 %v50
    %v554 = vunpack.c.l.b16 %v51
    %v555 = vunpack.c.l.b16 %v52
    %v556 = vunpack.c.l.b16 %v53
    %v557 = vunpack.c.l.b16 %v54
    %v558 = vunpack.c.l.b16 %v55
    %v559 = vunpack.c.l.b16 %v56
    %v560 = vunpack.c.l.b16 %v57
    %v561 = vunpack.c.l.b16 %v58
    %v562 = vunpack.c.l.b16 %v59
    %v563 = vunpack.c.l.b16 %v60
    %v564 = vunpack.c.l.b16 %v61
    %v565 = vunpack.c.l.b16 %v62
    %v566 = vunpack.c.l.b16 %v63
    %v567 = vunpack.c.l.b16 %v64
    %v568 = vunpack.c.l.b16 %v65
    %v569 = vunpack.c.l.b16 %v66
    %v570 = vunpack.c.l.b16 %v67
    %v571 = vunpack.c.l.b16 %v68
    %v572 = vunpack.c.l.b16 %v69
    %v573 = vunpack.c.l.b16 %v70
    %v574 = vunpack.c.l.b16 %v71
    %v575 = vunpack.c.l.b16 %v72
    %v576 = vunpack.c.l.b16 %v73
    %v577 = vunpack.c.l.b16 %v74
    %v578 = vunpack.c.l.b16 %v75
    %v579 = vunpack.c.l.b16 %v76
    %v580 = vunpack.c.l.b16 %v77
    %v581 = vunpack.c.l.b16 %v78
    %v582 = vunpack.c.l.b16 %v79
    %v583 = vunpack.c.l.b16 %v80
    %v584 = vunpack.c.l.b16 %v81
    %v585 = vunpack.c.l.b16 %v82
    %v586 = vunpack.c.l.b16 %v83
    %v587 = vunpack.c.l.b16 %v84
    %v588 = vunpack.c.l.b16 %v85
    %v589 = vunpack.c.l.b16 %v86
    %v590 = vunpack.c.l.b16 %v87
    %v591 = vunpack.c.l.b16 %v88
    %v592 = vunpack.c.l.b16 %v89
    %v593 = vunpack.c.l.b16 %v90
    %v594 = vunpack.c.l.b16 %v91
    %v595 = vunpack.c.l.b16 %v92
    %v596 = vunpack.c.l.b16 %v93
    %v597 = vunpack.c.l.b16 %v94
    %v598 = vunpack.c.l.b16 %v95
    %v599 = vunpack.c.l.b16 %v96
    %v600 = vunpack.c.l.b16 %v97
    %v601 = vunpack.c.l.b16 %v98
    %v602 = vunpack.c.l.b16 %v99
    %v603 = vunpack.c.l.b16 %v100
    %v604 = vunpack.c.l.b16 %v101
    %v605 = vunpack.c.l.b16 %v102
    %v606 = vunpack.c.l.b16 %v103
    %v607 = vunpack.c.l.b16 %v104
    %v608 = vunpack.c.l.b16 %v105
    %v609 = vunpack.c.l.b16 %v106
    %v610 = vunpack.c.l.b16 %v107
    %v611 = vunpack.c.l.b16 %v108
    %v612 = vunpack.c.l.b16 %v109
    %v613 = vunpack.c.l.b16 %v110
    %v614 = vunpack.c.l.b16 %v111
    %v615 = vunpack.c.l.b16 %v112
    %v616 = vunpack.c.l.b16 %v113
    %v617 = vunpack.c.l.b16 %v114
    %v618 = vunpack.c.l.b16 %v115
    %v619 = vunpack.c.l.b16 %v116
    %v620 = vunpack.c.l.b16 %v117
    %v621 = vunpack.c.l.b16 %v118
    %v622 = vunpack.c.l.b16 %v119
    %v623 = vunpack.c.l.b16 %v120
    %v624 = vunpack.c.l.b16 %v121
    %v625 = vunpack.c.l.b16 %v122
    %v626 = vunpack.c.l.b16 %v123
    %v627 = vunpack.c.l.b16 %v124
    %v628 = vunpack.c.l.b16 %v125
    %v629 = vunpack.c.l.b16 %v126
    %v630 = vunpack.c.l.b16 %v127
    %v631 = vunpack.c.l.b16 %v128
    %v632 = vunpack.c.l.b16 %v129
    %v633 = vunpack.c.l.b16 %v130
    %v634 = vunpack.c.l.b16 %v131
    %v635 = vunpack.c.l.b16 %v132
    %v636 = vunpack.c.l.b16 %v133
    %v637 = vunpack.c.l.b16 %v134
    %v638 = vunpack.c.l.b16 %v135
    %v639 = vunpack.c.l.b16 %v136
    %v640 = vunpack.c.l.b16 %v137
    %v641 = vunpack.c.l.b16 %v138
    %v642 = vunpack.c.l.b16 %v139
    %v643 = vunpack.c.l.b16 %v140
    %v644 = vunpack.c.l.b16 %v141
    %v645 = vunpack.c.l.b16 %v142
    %v646 = vunpack.c.l.b16 %v143
    %v647 = vunpack.c.l.b16 %v144
    %v648 = vunpack.c.l.b16 %v145
    %v649 = vpack.c.b16 %v554, %v553
    %v650 = vpack.c.b16 %v556, %v555
    %v651 = vpack.c.b16 %v558, %v557
    %v652 = vpack.c.b16 %v560, %v559
    %v653 = vpack.c.b16 %v562, %v561
    %v654 = vpack.c.b16 %v564, %v563
    %v655 = vpack.c.b16 %v566, %v565
    %v656 = vpack.c.b16 %v568, %v567
    %v657 = vpack.c.b16 %v570, %v569
    %v658 = vpack.c.b16 %v572, %v571
    %v659 = vpack.c.b16 %v574, %v573
    %v660 = vpack.c.b16 %v576, %v575
    %v661 = vpack.c.b16 %v578, %v577
    %v662 = vpack.c.b16 %v580, %v579
    %v663 = vpack.c.b16 %v582, %v581
    %v664 = vpack.c.b16 %v584, %v583
    %v665 = vpack.c.b16 %v586, %v585
    %v666 = vpack.c.b16 %v588, %v587
    %v667 = vpack.c.b16 %v590, %v589
    %v668 = vpack.c.b16 %v592, %v591
    %v669 = vpack.c.b16 %v594, %v593
    %v670 = vpack.c.b16 %v596, %v595
    %v671 = vpack.c.b16 %v598, %v597
    %v672 = vpack.c.b16 %v600, %v599
    %v673 = vpack.c.b16 %v602, %v601
    %v674 = vpack.c.b16 %v604, %v603
    %v675 = vpack.c.b16 %v606, %v605
    %v676 = vpack.c.b16 %v608, %v607
    %v677 = vpack.c.b16 %v610, %v609
    %v678 = vpack.c.b16 %v612, %v611
    %v679 = vpack.c.b16 %v614, %v613
    %v680 = vpack.c.b16 %v616, %v615
    %v681 = vpack.c.b16 %v618, %v617
    %v682 = vpack.c.b16 %v620, %v619
    %v683 = vpack.c.b16 %v622, %v621
    %v684 = vpack.c.b16 %v624, %v623
    %v685 = vpack.c.b16 %v626, %v625
    %v686 = vpack.c.b16 %v628, %v627
    %v687 = vpack.c.b16 %v630, %v629
    %v688 = vpack.c.b16 %v632, %v631
    %v689 = vpack.c.b16 %v634, %v633
    %v690 = vpack.c.b16 %v636, %v635
    %v691 = vpack.c.b16 %v638, %v637
    %v692 = vpack.c.b16 %v640, %v639
    %v693 = vpack.c.b16 %v642, %v641
    %v694 = vpack.c.b16 %v644, %v643
    %v695 = vpack.c.b16 %v646, %v645
    %v696 = vpack.c.b16 %v648, %v647
    %745 = vmatprep.subr.bf16.mxu0 0
    %746 = vmatpush1.bf16.msra.mxu0 %v649
    %747 = vmatprep.subr.bf16.mxu0 0
    %748 = vmatpush1.bf16.msra.mxu0 %v650
    %749 = vmatprep.subr.bf16.mxu0 0
    %750 = vmatpush1.bf16.msra.mxu0 %v651
    %751 = vmatprep.subr.bf16.mxu0 0
    %752 = vmatpush1.bf16.msra.mxu0 %v652
    %753 = vmatprep.subr.bf16.mxu0 0
    %754 = vmatpush1.bf16.msra.mxu0 %v653
    %755 = vmatprep.subr.bf16.mxu0 0
    %756 = vmatpush1.bf16.msra.mxu0 %v654
    %757 = vmatprep.subr.bf16.mxu0 0
    %758 = vmatpush1.bf16.msra.mxu0 %v655
    %759 = vmatprep.subr.bf16.mxu0 0
    %760 = vmatpush1.bf16.msra.mxu0 %v656
    %761 = vmatprep.subr.bf16.mxu0 0
    %762 = vmatpush1.bf16.msra.mxu0 %v657
    %763 = vmatprep.subr.bf16.mxu0 0
    %764 = vmatpush1.bf16.msra.mxu0 %v658
    %765 = vmatprep.subr.bf16.mxu0 0
    %766 = vmatpush1.bf16.msra.mxu0 %v659
    %767 = vmatprep.subr.bf16.mxu0 0
    %768 = vmatpush1.bf16.msra.mxu0 %v660
    %769 = vmatprep.subr.bf16.mxu0 0
    %770 = vmatpush1.bf16.msra.mxu0 %v661
    %771 = vmatprep.subr.bf16.mxu0 0
    %772 = vmatpush1.bf16.msra.mxu0 %v662
    %773 = vmatprep.subr.bf16.mxu0 0
    %774 = vmatpush1.bf16.msra.mxu0 %v663
    %775 = vmatprep.subr.bf16.mxu0 0
    %776 = vmatpush1.bf16.msra.mxu0 %v664
    %777 = vmatprep.mubr.bf16.mxu0 %v362
    %778 = vmatmul.mubr.bf16.gmra.mrb[0].mxu0 %v361
    %v779 = vpop.f32.mrb[0].mxu0
    %v780 = vadd.f32 %v215, %v779
    %v781 = vpop.f32.mrb[0].mxu0
    %v782 = vpop.f32.mrb[0].mxu0
    %v783 = vadd.f32 %v215, %v782
    %v784 = vpop.f32.mrb[0].mxu0
    %785 = vmatprep.mubr.bf16.mxu0 %v368
    %786 = vmatmul.mubr.bf16.gmra.mrb[0].mxu0 %v367
    %v787 = vpop.f32.mrb[0].mxu0
    %v788 = vadd.f32 %v215, %v787
    %v789 = vpop.f32.mrb[0].mxu0
    %v790 = vpop.f32.mrb[0].mxu0
    %v791 = vadd.f32 %v215, %v790
    %v792 = vpop.f32.mrb[0].mxu0
    %793 = vmatprep.mubr.bf16.mxu0 %v374
    %794 = vmatmul.mubr.bf16.gmra.mrb[0].mxu0 %v373
    %v795 = vpop.f32.mrb[0].mxu0
    %v796 = vadd.f32 %v215, %v795
    %v797 = vpop.f32.mrb[0].mxu0
    %v798 = vpop.f32.mrb[0].mxu0
    %v799 = vadd.f32 %v215, %v798
    %v800 = vpop.f32.mrb[0].mxu0
    %801 = vmatprep.mubr.bf16.mxu0 %v380
    %802 = vmatmul.mubr.bf16.gmra.mrb[0].mxu0 %v379
    %v803 = vpop.f32.mrb[0].mxu0
    %v804 = vadd.f32 %v215, %v803
    %v805 = vpop.f32.mrb[0].mxu0
    %v806 = vpop.f32.mrb[0].mxu0
    %v807 = vadd.f32 %v215, %v806
    %v808 = vpop.f32.mrb[0].mxu0
    %809 = vmatprep.mubr.bf16.mxu0 %v386
    %810 = vmatmul.mubr.bf16.gmra.mrb[0].mxu0 %v385
    %v811 = vpop.f32.mrb[0].mxu0
    %v812 = vadd.f32 %v215, %v811
    %v813 = vpop.f32.mrb[0].mxu0
    %v814 = vpop.f32.mrb[0].mxu0
    %v815 = vadd.f32 %v215, %v814
    %v816 = vpop.f32.mrb[0].mxu0
    %817 = vmatprep.mubr.bf16.mxu0 %v392
    %818 = vmatmul.mubr.bf16.gmra.mrb[0].mxu0 %v391
    %v819 = vpop.f32.mrb[0].mxu0
    %v820 = vadd.f32 %v215, %v819
    %v821 = vpop.f32.mrb[0].mxu0
    %v822 = vpop.f32.mrb[0].mxu0
    %v823 = vadd.f32 %v215, %v822
    %v824 = vpop.f32.mrb[0].mxu0
    %825 = vmatprep.mubr.bf16.mxu0 %v398
    %826 = vmatmul.mubr.bf16.gmra.mrb[0].mxu0 %v397
    %v827 = vpop.f32.mrb[0].mxu0
    %v828 = vadd.f32 %v215, %v827
    %v829 = vpop.f32.mrb[0].mxu0
    %v830 = vpop.f32.mrb[0].mxu0
    %v831 = vadd.f32 %v215, %v830
    %v832 = vpop.f32.mrb[0].mxu0
    %833 = vmatprep.mubr.bf16.mxu0 %v404
    %834 = vmatmul.mubr.bf16.gmra.mrb[0].mxu0 %v403
    %v835 = vpop.f32.mrb[0].mxu0
    %v836 = vadd.f32 %v215, %v835
    %v837 = vpop.f32.mrb[0].mxu0
    %v838 = vpop.f32.mrb[0].mxu0
    %v839 = vadd.f32 %v215, %v838
    %v840 = vpop.f32.mrb[0].mxu0
    %841 = vdwg.mxu0
    %842 = vmatprep.subr.bf16.mxu0 0
    %843 = vmatpush1.bf16.msra.mxu0 %v665
    %844 = vmatprep.subr.bf16.mxu0 0
    %845 = vmatpush1.bf16.msra.mxu0 %v666
    %846 = vmatprep.subr.bf16.mxu0 0
    %847 = vmatpush1.bf16.msra.mxu0 %v667
    %848 = vmatprep.subr.bf16.mxu0 0
    %849 = vmatpush1.bf16.msra.mxu0 %v668
    %850 = vmatprep.subr.bf16.mxu0 0
    %851 = vmatpush1.bf16.msra.mxu0 %v669
    %852 = vmatprep.subr.bf16.mxu0 0
    %853 = vmatpush1.bf16.msra.mxu0 %v670
    %854 = vmatprep.subr.bf16.mxu0 0
    %855 = vmatpush1.bf16.msra.mxu0 %v671
    %856 = vmatprep.subr.bf16.mxu0 0
    %857 = vmatpush1.bf16.msra.mxu0 %v672
    %858 = vmatprep.subr.bf16.mxu0 0
    %859 = vmatpush1.bf16.msra.mxu0 %v673
    %860 = vmatprep.subr.bf16.mxu0 0
    %861 = vmatpush1.bf16.msra.mxu0 %v674
    %862 = vmatprep.subr.bf16.mxu0 0
    %863 = vmatpush1.bf16.msra.mxu0 %v675
    %864 = vmatprep.subr.bf16.mxu0 0
    %865 = vmatpush1.bf16.msra.mxu0 %v676
    %866 = vmatprep.subr.bf16.mxu0 0
    %867 = vmatpush1.bf16.msra.mxu0 %v677
    %868 = vmatprep.subr.bf16.mxu0 0
    %869 = vmatpush1.bf16.msra.mxu0 %v678
    %870 = vmatprep.subr.bf16.mxu0 0
    %871 = vmatpush1.bf16.msra.mxu0 %v679
    %872 = vmatprep.subr.bf16.mxu0 0
    %873 = vmatpush1.bf16.msra.mxu0 %v680
    %874 = vmatprep.mubr.bf16.mxu0 %v364
    %875 = vmatmul.mubr.bf16.gmra.mrb[0].mxu0 %v363
    %v876 = vpop.f32.mrb[0].mxu0
    %v877 = vadd.f32 %v780, %v876
    %v878 = vpop.f32.mrb[0].mxu0
    %v879 = vpop.f32.mrb[0].mxu0
    %v880 = vadd.f32 %v783, %v879
    %v881 = vpop.f32.mrb[0].mxu0
    %882 = vmatprep.mubr.bf16.mxu0 %v370
    %883 = vmatmul.mubr.bf16.gmra.mrb[0].mxu0 %v369
    %v884 = vpop.f32.mrb[0].mxu0
    %v885 = vadd.f32 %v788, %v884
    %v886 = vpop.f32.mrb[0].mxu0
    %v887 = vpop.f32.mrb[0].mxu0
    %v888 = vadd.f32 %v791, %v887
    %v889 = vpop.f32.mrb[0].mxu0
    %890 = vmatprep.mubr.bf16.mxu0 %v376
    %891 = vmatmul.mubr.bf16.gmra.mrb[0].mxu0 %v375
    %v892 = vpop.f32.mrb[0].mxu0
    %v893 = vadd.f32 %v796, %v892
    %v894 = vpop.f32.mrb[0].mxu0
    %v895 = vpop.f32.mrb[0].mxu0
    %v896 = vadd.f32 %v799, %v895
    %v897 = vpop.f32.mrb[0].mxu0
    %898 = vmatprep.mubr.bf16.mxu0 %v382
    %899 = vmatmul.mubr.bf16.gmra.mrb[0].mxu0 %v381
    %v900 = vpop.f32.mrb[0].mxu0
    %v901 = vadd.f32 %v804, %v900
    %v902 = vpop.f32.mrb[0].mxu0
    %v903 = vpop.f32.mrb[0].mxu0
    %v904 = vadd.f32 %v807, %v903
    %v905 = vpop.f32.mrb[0].mxu0
    %906 = vmatprep.mubr.bf16.mxu0 %v388
    %907 = vmatmul.mubr.bf16.gmra.mrb[0].mxu0 %v387
    %v908 = vpop.f32.mrb[0].mxu0
    %v909 = vadd.f32 %v812, %v908
    %v910 = vpop.f32.mrb[0].mxu0
    %v911 = vpop.f32.mrb[0].mxu0
    %v912 = vadd.f32 %v815, %v911
    %v913 = vpop.f32.mrb[0].mxu0
    %914 = vmatprep.mubr.bf16.mxu0 %v394
    %915 = vmatmul.mubr.bf16.gmra.mrb[0].mxu0 %v393
    %v916 = vpop.f32.mrb[0].mxu0
    %v917 = vadd.f32 %v820, %v916
    %v918 = vpop.f32.mrb[0].mxu0
    %v919 = vpop.f32.mrb[0].mxu0
    %v920 = vadd.f32 %v823, %v919
    %v921 = vpop.f32.mrb[0].mxu0
    %922 = vmatprep.mubr.bf16.mxu0 %v400
    %923 = vmatmul.mubr.bf16.gmra.mrb[0].mxu0 %v399
    %v924 = vpop.f32.mrb[0].mxu0
    %v925 = vadd.f32 %v828, %v924
    %v926 = vpop.f32.mrb[0].mxu0
    %v927 = vpop.f32.mrb[0].mxu0
    %v928 = vadd.f32 %v831, %v927
    %v929 = vpop.f32.mrb[0].mxu0
    %930 = vmatprep.mubr.bf16.mxu0 %v406
    %931 = vmatmul.mubr.bf16.gmra.mrb[0].mxu0 %v405
    %v932 = vpop.f32.mrb[0].mxu0
    %v933 = vadd.f32 %v836, %v932
    %v934 = vpop.f32.mrb[0].mxu0
    %v935 = vpop.f32.mrb[0].mxu0
    %v936 = vadd.f32 %v839, %v935
    %v937 = vpop.f32.mrb[0].mxu0
    %938 = vdwg.mxu0
    %939 = vmatprep.subr.bf16.mxu0 0
    %940 = vmatpush1.bf16.msra.mxu0 %v681
    %941 = vmatprep.subr.bf16.mxu0 0
    %942 = vmatpush1.bf16.msra.mxu0 %v682
    %943 = vmatprep.subr.bf16.mxu0 0
    %944 = vmatpush1.bf16.msra.mxu0 %v683
    %945 = vmatprep.subr.bf16.mxu0 0
    %946 = vmatpush1.bf16.msra.mxu0 %v684
    %947 = vmatprep.subr.bf16.mxu0 0
    %948 = vmatpush1.bf16.msra.mxu0 %v685
    %949 = vmatprep.subr.bf16.mxu0 0
    %950 = vmatpush1.bf16.msra.mxu0 %v686
    %951 = vmatprep.subr.bf16.mxu0 0
    %952 = vmatpush1.bf16.msra.mxu0 %v687
    %953 = vmatprep.subr.bf16.mxu0 0
    %954 = vmatpush1.bf16.msra.mxu0 %v688
    %955 = vmatprep.subr.bf16.mxu0 0
    %956 = vmatpush1.bf16.msra.mxu0 %v689
    %957 = vmatprep.subr.bf16.mxu0 0
    %958 = vmatpush1.bf16.msra.mxu0 %v690
    %959 = vmatprep.subr.bf16.mxu0 0
    %960 = vmatpush1.bf16.msra.mxu0 %v691
    %961 = vmatprep.subr.bf16.mxu0 0
    %962 = vmatpush1.bf16.msra.mxu0 %v692
    %963 = vmatprep.subr.bf16.mxu0 0
    %964 = vmatpush1.bf16.msra.mxu0 %v693
    %965 = vmatprep.subr.bf16.mxu0 0
    %966 = vmatpush1.bf16.msra.mxu0 %v694
    %967 = vmatprep.subr.bf16.mxu0 0
    %968 = vmatpush1.bf16.msra.mxu0 %v695
    %969 = vmatprep.subr.bf16.mxu0 0
    %970 = vmatpush1.bf16.msra.mxu0 %v696
    %971 = vmatprep.mubr.bf16.mxu0 %v366
    %972 = vmatmul.mubr.bf16.gmra.mrb[0].mxu0 %v365
    %v973 = vpop.f32.mrb[0].mxu0
    %v974 = vadd.f32 %v877, %v973
    %v975 = vpop.f32.mrb[0].mxu0
    %v976 = vpop.f32.mrb[0].mxu0
    %v977 = vadd.f32 %v880, %v976
    %v978 = vpop.f32.mrb[0].mxu0
    %979 = vmatprep.mubr.bf16.mxu0 %v372
    %980 = vmatmul.mubr.bf16.gmra.mrb[0].mxu0 %v371
    %v981 = vpop.f32.mrb[0].mxu0
    %v982 = vadd.f32 %v885, %v981
    %v983 = vpop.f32.mrb[0].mxu0
    %v984 = vpop.f32.mrb[0].mxu0
    %v985 = vadd.f32 %v888, %v984
    %v986 = vpop.f32.mrb[0].mxu0
    %987 = vmatprep.mubr.bf16.mxu0 %v378
    %988 = vmatmul.mubr.bf16.gmra.mrb[0].mxu0 %v377
    %v989 = vpop.f32.mrb[0].mxu0
    %v990 = vadd.f32 %v893, %v989
    %v991 = vpop.f32.mrb[0].mxu0
    %v992 = vpop.f32.mrb[0].mxu0
    %v993 = vadd.f32 %v896, %v992
    %v994 = vpop.f32.mrb[0].mxu0
    %995 = vmatprep.mubr.bf16.mxu0 %v384
    %996 = vmatmul.mubr.bf16.gmra.mrb[0].mxu0 %v383
    %v997 = vpop.f32.mrb[0].mxu0
    %v998 = vadd.f32 %v901, %v997
    %v999 = vpop.f32.mrb[0].mxu0
    %v1000 = vpop.f32.mrb[0].mxu0
    %v1001 = vadd.f32 %v904, %v1000
    %v1002 = vpop.f32.mrb[0].mxu0
    %1003 = vmatprep.mubr.bf16.mxu0 %v390
    %1004 = vmatmul.mubr.bf16.gmra.mrb[0].mxu0 %v389
    %v1005 = vpop.f32.mrb[0].mxu0
    %v1006 = vadd.f32 %v909, %v1005
    %v1007 = vpop.f32.mrb[0].mxu0
    %v1008 = vpop.f32.mrb[0].mxu0
    %v1009 = vadd.f32 %v912, %v1008
    %v1010 = vpop.f32.mrb[0].mxu0
    %1011 = vmatprep.mubr.bf16.mxu0 %v396
    %1012 = vmatmul.mubr.bf16.gmra.mrb[0].mxu0 %v395
    %v1013 = vpop.f32.mrb[0].mxu0
    %v1014 = vadd.f32 %v917, %v1013
    %v1015 = vpop.f32.mrb[0].mxu0
    %v1016 = vpop.f32.mrb[0].mxu0
    %v1017 = vadd.f32 %v920, %v1016
    %v1018 = vpop.f32.mrb[0].mxu0
    %1019 = vmatprep.mubr.bf16.mxu0 %v402
    %1020 = vmatmul.mubr.bf16.gmra.mrb[0].mxu0 %v401
    %v1021 = vpop.f32.mrb[0].mxu0
    %v1022 = vadd.f32 %v925, %v1021
    %v1023 = vpop.f32.mrb[0].mxu0
    %v1024 = vpop.f32.mrb[0].mxu0
    %v1025 = vadd.f32 %v928, %v1024
    %v1026 = vpop.f32.mrb[0].mxu0
    %1027 = vmatprep.mubr.bf16.mxu0 %v408
    %1028 = vmatmul.mubr.bf16.gmra.mrb[0].mxu0 %v407
    %v1029 = vpop.f32.mrb[0].mxu0
    %v1030 = vadd.f32 %v933, %v1029
    %v1031 = vpop.f32.mrb[0].mxu0
    %v1032 = vpop.f32.mrb[0].mxu0
    %v1033 = vadd.f32 %v936, %v1032
    %v1034 = vpop.f32.mrb[0].mxu0
    %1035 = vdwg.mxu0
    %v1036 = vmax.f32 %v974, 0.0
    %v1037 = vmax.f32 %v977, 0.0
    %v1038 = vmax.f32 %v982, 0.0
    %v1039 = vmax.f32 %v985, 0.0
    %v1040 = vmax.f32 %v990, 0.0
    %v1041 = vmax.f32 %v993, 0.0
    %v1042 = vmax.f32 %v998, 0.0
    %v1043 = vmax.f32 %v1001, 0.0
    %v1044 = vmax.f32 %v1006, 0.0
    %v1045 = vmax.f32 %v1009, 0.0
    %v1046 = vmax.f32 %v1014, 0.0
    %v1047 = vmax.f32 %v1017, 0.0
    %v1048 = vmax.f32 %v1022, 0.0
    %v1049 = vmax.f32 %v1025, 0.0
    %v1050 = vmax.f32 %v1030, 0.0
    %v1051 = vmax.f32 %v1033, 0.0
    %v1052 = vpack.c.bf16 %v1037, %v1036
    %v1053 = vpack.c.bf16 %v1039, %v1038
    %v1054 = vpack.c.bf16 %v1041, %v1040
    %v1055 = vpack.c.bf16 %v1043, %v1042
    %v1056 = vpack.c.bf16 %v1045, %v1044
    %v1057 = vpack.c.bf16 %v1047, %v1046
    %v1058 = vpack.c.bf16 %v1049, %v1048
    %v1059 = vpack.c.bf16 %v1051, %v1050
    %v1061 = vlaneseq
    %v1062 = vshrl.u32 %v1061, 7
    %v1063 = vsub.s32 0, %v1062
    %v1064 = vrot.slane %v160, %v1063
    %v1074 = vunpack.c.l.b16 %v146
    %v1075 = vunpack.c.l.b16 %v147
    %v1076 = vunpack.c.l.b16 %v148
    %v1077 = vunpack.c.l.b16 %v149
    %v1078 = vunpack.c.l.b16 %v150
    %v1079 = vunpack.c.l.b16 %v151
    %v1080 = vunpack.c.l.b16 %v152
    %v1081 = vunpack.c.l.b16 %v153
    %v1082 = vpack.c.b16 %v1075, %v1074
    %v1083 = vpack.c.b16 %v1077, %v1076
    %v1084 = vpack.c.b16 %v1079, %v1078
    %v1085 = vpack.c.b16 %v1081, %v1080
    %vm1090 = vcmask 523264
    %v1092 = vsel %vm1090, %v1052, 0
    %v1095 = vsel %vm1090, %v1053, 0
    %v1098 = vsel %vm1090, %v1054, 0
    %v1101 = vsel %vm1090, %v1055, 0
    %v1104 = vsel %vm1090, %v1056, 0
    %v1107 = vsel %vm1090, %v1057, 0
    %v1110 = vsel %vm1090, %v1058, 0
    %v1113 = vsel %vm1090, %v1059, 0
    %1115 = vmatprep.subr.bf16.mxu0 0
    %1116 = vmatpush1.bf16.msra.mxu0 %v1082
    %1117 = vmatprep.subr.bf16.mxu0 0
    %1118 = vmatpush1.bf16.msra.mxu0 %v1083
    %1119 = vmatprep.subr.bf16.mxu0 0
    %1120 = vmatpush1.bf16.msra.mxu0 %v1084
    %1121 = vmatprep.subr.bf16.mxu0 0
    %1122 = vmatpush1.bf16.msra.mxu0 %v1085
    %1123 = vmatprep.subr.bf16.mxu0 0
    %1124 = vmatpush1.bf16.msra.mxu0 0
    %1125 = vmatprep.subr.bf16.mxu0 0
    %1126 = vmatpush1.bf16.msra.mxu0 0
    %1127 = vmatprep.subr.bf16.mxu0 0
    %1128 = vmatpush1.bf16.msra.mxu0 0
    %1129 = vmatprep.subr.bf16.mxu0 0
    %1130 = vmatpush1.bf16.msra.mxu0 0
    %1131 = vmatprep.subr.bf16.mxu0 0
    %1132 = vmatpush1.bf16.msra.mxu0 0
    %1133 = vmatprep.subr.bf16.mxu0 0
    %1134 = vmatpush1.bf16.msra.mxu0 0
    %1135 = vmatprep.subr.bf16.mxu0 0
    %1136 = vmatpush1.bf16.msra.mxu0 0
    %1137 = vmatprep.subr.bf16.mxu0 0
    %1138 = vmatpush1.bf16.msra.mxu0 0
    %1139 = vmatprep.subr.bf16.mxu0 0
    %1140 = vmatpush1.bf16.msra.mxu0 0
    %1141 = vmatprep.subr.bf16.mxu0 0
    %1142 = vmatpush1.bf16.msra.mxu0 0
    %1143 = vmatprep.subr.bf16.mxu0 0
    %1144 = vmatpush1.bf16.msra.mxu0 0
    %1145 = vmatprep.subr.bf16.mxu0 0
    %1146 = vmatpush1.bf16.msra.mxu0 0
    %1147 = vmatprep.mubr.bf16.mxu0 0
    %1148 = vmatmul.mubr.bf16.gmra.mrb[0].mxu0 %v1092
    %v1149 = vpop.f32.mrb[0].mxu0
    %v1150 = vadd.f32 %v1064, %v1149
    %v1151 = vpop.f32.mrb[0].mxu0
    %v1152 = vpop.f32.mrb[0].mxu0
    %v1153 = vadd.f32 %v1064, %v1152
    %v1154 = vpop.f32.mrb[0].mxu0
    %1155 = vmatprep.mubr.bf16.mxu0 0
    %1156 = vmatmul.mubr.bf16.gmra.mrb[0].mxu0 %v1095
    %v1157 = vpop.f32.mrb[0].mxu0
    %v1158 = vadd.f32 %v1064, %v1157
    %v1159 = vpop.f32.mrb[0].mxu0
    %v1160 = vpop.f32.mrb[0].mxu0
    %v1161 = vadd.f32 %v1064, %v1160
    %v1162 = vpop.f32.mrb[0].mxu0
    %1163 = vmatprep.mubr.bf16.mxu0 0
    %1164 = vmatmul.mubr.bf16.gmra.mrb[0].mxu0 %v1098
    %v1165 = vpop.f32.mrb[0].mxu0
    %v1166 = vadd.f32 %v1064, %v1165
    %v1167 = vpop.f32.mrb[0].mxu0
    %v1168 = vpop.f32.mrb[0].mxu0
    %v1169 = vadd.f32 %v1064, %v1168
    %v1170 = vpop.f32.mrb[0].mxu0
    %1171 = vmatprep.mubr.bf16.mxu0 0
    %1172 = vmatmul.mubr.bf16.gmra.mrb[0].mxu0 %v1101
    %v1173 = vpop.f32.mrb[0].mxu0
    %v1174 = vadd.f32 %v1064, %v1173
    %v1175 = vpop.f32.mrb[0].mxu0
    %v1176 = vpop.f32.mrb[0].mxu0
    %v1177 = vadd.f32 %v1064, %v1176
    %v1178 = vpop.f32.mrb[0].mxu0
    %1179 = vmatprep.mubr.bf16.mxu0 0
    %1180 = vmatmul.mubr.bf16.gmra.mrb[0].mxu0 %v1104
    %v1181 = vpop.f32.mrb[0].mxu0
    %v1182 = vadd.f32 %v1064, %v1181
    %v1183 = vpop.f32.mrb[0].mxu0
    %v1184 = vpop.f32.mrb[0].mxu0
    %v1185 = vadd.f32 %v1064, %v1184
    %v1186 = vpop.f32.mrb[0].mxu0
    %1187 = vmatprep.mubr.bf16.mxu0 0
    %1188 = vmatmul.mubr.bf16.gmra.mrb[0].mxu0 %v1107
    %v1189 = vpop.f32.mrb[0].mxu0
    %v1190 = vadd.f32 %v1064, %v1189
    %v1191 = vpop.f32.mrb[0].mxu0
    %v1192 = vpop.f32.mrb[0].mxu0
    %v1193 = vadd.f32 %v1064, %v1192
    %v1194 = vpop.f32.mrb[0].mxu0
    %1195 = vmatprep.mubr.bf16.mxu0 0
    %1196 = vmatmul.mubr.bf16.gmra.mrb[0].mxu0 %v1110
    %v1197 = vpop.f32.mrb[0].mxu0
    %v1198 = vadd.f32 %v1064, %v1197
    %v1199 = vpop.f32.mrb[0].mxu0
    %v1200 = vpop.f32.mrb[0].mxu0
    %v1201 = vadd.f32 %v1064, %v1200
    %v1202 = vpop.f32.mrb[0].mxu0
    %1203 = vmatprep.mubr.bf16.mxu0 0
    %1204 = vmatmul.mubr.bf16.gmra.mrb[0].mxu0 %v1113
    %v1205 = vpop.f32.mrb[0].mxu0
    %v1206 = vadd.f32 %v1064, %v1205
    %v1207 = vpop.f32.mrb[0].mxu0
    %v1208 = vpop.f32.mrb[0].mxu0
    %v1209 = vadd.f32 %v1064, %v1208
    %v1210 = vpop.f32.mrb[0].mxu0
    %1211 = vdwg.mxu0
    %v1212 = vmax.f32 %v1150, 0.0
    %v1213 = vmax.f32 %v1153, 0.0
    %v1214 = vmax.f32 %v1158, 0.0
    %v1215 = vmax.f32 %v1161, 0.0
    %v1216 = vmax.f32 %v1166, 0.0
    %v1217 = vmax.f32 %v1169, 0.0
    %v1218 = vmax.f32 %v1174, 0.0
    %v1219 = vmax.f32 %v1177, 0.0
    %v1220 = vmax.f32 %v1182, 0.0
    %v1221 = vmax.f32 %v1185, 0.0
    %v1222 = vmax.f32 %v1190, 0.0
    %v1223 = vmax.f32 %v1193, 0.0
    %v1224 = vmax.f32 %v1198, 0.0
    %v1225 = vmax.f32 %v1201, 0.0
    %v1226 = vmax.f32 %v1206, 0.0
    %v1227 = vmax.f32 %v1209, 0.0
    %v1228 = vpack.c.bf16 %v1213, %v1212
    %v1229 = vpack.c.bf16 %v1215, %v1214
    %v1230 = vpack.c.bf16 %v1217, %v1216
    %v1231 = vpack.c.bf16 %v1219, %v1218
    %v1232 = vpack.c.bf16 %v1221, %v1220
    %v1233 = vpack.c.bf16 %v1223, %v1222
    %v1234 = vpack.c.bf16 %v1225, %v1224
    %v1235 = vpack.c.bf16 %v1227, %v1226
    %v1237 = vlaneseq
    %v1238 = vshrl.u32 %v1237, 7
    %v1239 = vsub.s32 0, %v1238
    %v1240 = vrot.slane %v161, %v1239
    %v1246 = vunpack.c.l.b16 %v154
    %v1247 = vunpack.c.l.b16 %v155
    %v1248 = vunpack.c.l.b16 %v156
    %v1249 = vunpack.c.l.b16 %v157
    %v1250 = vpack.c.b16 %v1247, %v1246
    %v1251 = vpack.c.b16 %v1249, %v1248
    %vm1254 = vcmask 261120
    %v1256 = vsel %vm1254, %v1228, 0
    %v1259 = vsel %vm1254, %v1229, 0
    %v1262 = vsel %vm1254, %v1230, 0
    %v1265 = vsel %vm1254, %v1231, 0
    %v1268 = vsel %vm1254, %v1232, 0
    %v1271 = vsel %vm1254, %v1233, 0
    %v1274 = vsel %vm1254, %v1234, 0
    %v1277 = vsel %vm1254, %v1235, 0
    %1279 = vmatprep.subr.bf16.mxu0 0
    %1280 = vmatpush1.bf16.msra.mxu0 %v1250
    %1281 = vmatprep.subr.bf16.mxu0 0
    %1282 = vmatpush1.bf16.msra.mxu0 %v1251
    %1283 = vmatprep.subr.bf16.mxu0 0
    %1284 = vmatpush1.bf16.msra.mxu0 0
    %1285 = vmatprep.subr.bf16.mxu0 0
    %1286 = vmatpush1.bf16.msra.mxu0 0
    %1287 = vmatprep.subr.bf16.mxu0 0
    %1288 = vmatpush1.bf16.msra.mxu0 0
    %1289 = vmatprep.subr.bf16.mxu0 0
    %1290 = vmatpush1.bf16.msra.mxu0 0
    %1291 = vmatprep.subr.bf16.mxu0 0
    %1292 = vmatpush1.bf16.msra.mxu0 0
    %1293 = vmatprep.subr.bf16.mxu0 0
    %1294 = vmatpush1.bf16.msra.mxu0 0
    %1295 = vmatprep.subr.bf16.mxu0 0
    %1296 = vmatpush1.bf16.msra.mxu0 0
    %1297 = vmatprep.subr.bf16.mxu0 0
    %1298 = vmatpush1.bf16.msra.mxu0 0
    %1299 = vmatprep.subr.bf16.mxu0 0
    %1300 = vmatpush1.bf16.msra.mxu0 0
    %1301 = vmatprep.subr.bf16.mxu0 0
    %1302 = vmatpush1.bf16.msra.mxu0 0
    %1303 = vmatprep.subr.bf16.mxu0 0
    %1304 = vmatpush1.bf16.msra.mxu0 0
    %1305 = vmatprep.subr.bf16.mxu0 0
    %1306 = vmatpush1.bf16.msra.mxu0 0
    %1307 = vmatprep.subr.bf16.mxu0 0
    %1308 = vmatpush1.bf16.msra.mxu0 0
    %1309 = vmatprep.subr.bf16.mxu0 0
    %1310 = vmatpush1.bf16.msra.mxu0 0
    %1311 = vmatprep.mubr.bf16.mxu0 0
    %1312 = vmatmul.mubr.bf16.gmra.mrb[0].mxu0 %v1256
    %v1313 = vpop.f32.mrb[0].mxu0
    %v1314 = vadd.f32 %v1240, %v1313
    %v1315 = vpop.f32.mrb[0].mxu0
    %v1316 = vpop.f32.mrb[0].mxu0
    %v1317 = vadd.f32 %v1240, %v1316
    %v1318 = vpop.f32.mrb[0].mxu0
    %1319 = vmatprep.mubr.bf16.mxu0 0
    %1320 = vmatmul.mubr.bf16.gmra.mrb[0].mxu0 %v1259
    %v1321 = vpop.f32.mrb[0].mxu0
    %v1322 = vadd.f32 %v1240, %v1321
    %v1323 = vpop.f32.mrb[0].mxu0
    %v1324 = vpop.f32.mrb[0].mxu0
    %v1325 = vadd.f32 %v1240, %v1324
    %v1326 = vpop.f32.mrb[0].mxu0
    %1327 = vmatprep.mubr.bf16.mxu0 0
    %1328 = vmatmul.mubr.bf16.gmra.mrb[0].mxu0 %v1262
    %v1329 = vpop.f32.mrb[0].mxu0
    %v1330 = vadd.f32 %v1240, %v1329
    %v1331 = vpop.f32.mrb[0].mxu0
    %v1332 = vpop.f32.mrb[0].mxu0
    %v1333 = vadd.f32 %v1240, %v1332
    %v1334 = vpop.f32.mrb[0].mxu0
    %1335 = vmatprep.mubr.bf16.mxu0 0
    %1336 = vmatmul.mubr.bf16.gmra.mrb[0].mxu0 %v1265
    %v1337 = vpop.f32.mrb[0].mxu0
    %v1338 = vadd.f32 %v1240, %v1337
    %v1339 = vpop.f32.mrb[0].mxu0
    %v1340 = vpop.f32.mrb[0].mxu0
    %v1341 = vadd.f32 %v1240, %v1340
    %v1342 = vpop.f32.mrb[0].mxu0
    %1343 = vmatprep.mubr.bf16.mxu0 0
    %1344 = vmatmul.mubr.bf16.gmra.mrb[0].mxu0 %v1268
    %v1345 = vpop.f32.mrb[0].mxu0
    %v1346 = vadd.f32 %v1240, %v1345
    %v1347 = vpop.f32.mrb[0].mxu0
    %v1348 = vpop.f32.mrb[0].mxu0
    %v1349 = vadd.f32 %v1240, %v1348
    %v1350 = vpop.f32.mrb[0].mxu0
    %1351 = vmatprep.mubr.bf16.mxu0 0
    %1352 = vmatmul.mubr.bf16.gmra.mrb[0].mxu0 %v1271
    %v1353 = vpop.f32.mrb[0].mxu0
    %v1354 = vadd.f32 %v1240, %v1353
    %v1355 = vpop.f32.mrb[0].mxu0
    %v1356 = vpop.f32.mrb[0].mxu0
    %v1357 = vadd.f32 %v1240, %v1356
    %v1358 = vpop.f32.mrb[0].mxu0
    %1359 = vmatprep.mubr.bf16.mxu0 0
    %1360 = vmatmul.mubr.bf16.gmra.mrb[0].mxu0 %v1274
    %v1361 = vpop.f32.mrb[0].mxu0
    %v1362 = vadd.f32 %v1240, %v1361
    %v1363 = vpop.f32.mrb[0].mxu0
    %v1364 = vpop.f32.mrb[0].mxu0
    %v1365 = vadd.f32 %v1240, %v1364
    %v1366 = vpop.f32.mrb[0].mxu0
    %1367 = vmatprep.mubr.bf16.mxu0 0
    %1368 = vmatmul.mubr.bf16.gmra.mrb[0].mxu0 %v1277
    %v1369 = vpop.f32.mrb[0].mxu0
    %v1370 = vadd.f32 %v1240, %v1369
    %v1371 = vpop.f32.mrb[0].mxu0
    %v1372 = vpop.f32.mrb[0].mxu0
    %v1373 = vadd.f32 %v1240, %v1372
    %v1374 = vpop.f32.mrb[0].mxu0
    %1375 = vdwg.mxu0
    %v1376 = vmax.f32 %v1314, 0.0
    %v1377 = vmax.f32 %v1317, 0.0
    %v1378 = vmax.f32 %v1322, 0.0
    %v1379 = vmax.f32 %v1325, 0.0
    %v1380 = vmax.f32 %v1330, 0.0
    %v1381 = vmax.f32 %v1333, 0.0
    %v1382 = vmax.f32 %v1338, 0.0
    %v1383 = vmax.f32 %v1341, 0.0
    %v1384 = vmax.f32 %v1346, 0.0
    %v1385 = vmax.f32 %v1349, 0.0
    %v1386 = vmax.f32 %v1354, 0.0
    %v1387 = vmax.f32 %v1357, 0.0
    %v1388 = vmax.f32 %v1362, 0.0
    %v1389 = vmax.f32 %v1365, 0.0
    %v1390 = vmax.f32 %v1370, 0.0
    %v1391 = vmax.f32 %v1373, 0.0
    %1393 = vset.pattern.permute.xlu0 0
    %1394 = vperm.xlu0 %1393, %v162
    %v1395 = vpop.permute.xlu0 %1394
    %v1397 = vlaneseq
    %v1398 = vshrl.u32 %v1397, 7
    %v1399 = vsub.s32 0, %v1398
    %v1400 = vrot.slane %v1395, %v1399
    %vm1401 = vcmask 130048
    %v1403 = vsel %vm1401, %v158, 0
    %v1406 = vsel %vm1401, %v1376, 0
    %v1409 = vsel %vm1401, %v1377, 0
    %v1412 = vsel %vm1401, %v1378, 0
    %v1415 = vsel %vm1401, %v1379, 0
    %v1418 = vsel %vm1401, %v1380, 0
    %v1421 = vsel %vm1401, %v1381, 0
    %v1424 = vsel %vm1401, %v1382, 0
    %v1427 = vsel %vm1401, %v1383, 0
    %v1430 = vsel %vm1401, %v1384, 0
    %v1433 = vsel %vm1401, %v1385, 0
    %v1436 = vsel %vm1401, %v1386, 0
    %v1439 = vsel %vm1401, %v1387, 0
    %v1442 = vsel %vm1401, %v1388, 0
    %v1445 = vsel %vm1401, %v1389, 0
    %v1448 = vsel %vm1401, %v1390, 0
    %v1451 = vsel %vm1401, %v1391, 0
    %1453 = vmatprep.subr.mxu0 0.0
    %1454 = vmatpush1.xpose.msra.mxu0 %v1406
    %1455 = vmatprep.subr.mxu0 0.0
    %1456 = vmatpush1.xpose.msra.mxu0 %v1409
    %1457 = vmatprep.subr.mxu0 0.0
    %1458 = vmatpush1.xpose.msra.mxu0 %v1412
    %1459 = vmatprep.subr.mxu0 0.0
    %1460 = vmatpush1.xpose.msra.mxu0 %v1415
    %1461 = vmatprep.subr.mxu0 0.0
    %1462 = vmatpush1.xpose.msra.mxu0 %v1418
    %1463 = vmatprep.subr.mxu0 0.0
    %1464 = vmatpush1.xpose.msra.mxu0 %v1421
    %1465 = vmatprep.subr.mxu0 0.0
    %1466 = vmatpush1.xpose.msra.mxu0 %v1424
    %1467 = vmatprep.subr.mxu0 0.0
    %1468 = vmatpush1.xpose.msra.mxu0 %v1427
    %1469 = vmatprep.subr.mxu0 0.0
    %1470 = vmatpush1.xpose.msra.mxu0 %v1430
    %1471 = vmatprep.subr.mxu0 0.0
    %1472 = vmatpush1.xpose.msra.mxu0 %v1433
    %1473 = vmatprep.subr.mxu0 0.0
    %1474 = vmatpush1.xpose.msra.mxu0 %v1436
    %1475 = vmatprep.subr.mxu0 0.0
    %1476 = vmatpush1.xpose.msra.mxu0 %v1439
    %1477 = vmatprep.subr.mxu0 0.0
    %1478 = vmatpush1.xpose.msra.mxu0 %v1442
    %1479 = vmatprep.subr.mxu0 0.0
    %1480 = vmatpush1.xpose.msra.mxu0 %v1445
    %1481 = vmatprep.subr.mxu0 0.0
    %1482 = vmatpush1.xpose.msra.mxu0 %v1448
    %1483 = vmatprep.subr.mxu0 0.0
    %1484 = vmatpush1.xpose.msra.mxu0 %v1451
    %1485 = vmatprep.subr.mxu0 0.0
    %1486 = vmatpush1.xpose.msra.mxu0 0.0
    %1487 = vmatprep.subr.mxu0 0.0
    %1488 = vmatpush1.xpose.msra.mxu0 0.0
    %1489 = vmatprep.subr.mxu0 0.0
    %1490 = vmatpush1.xpose.msra.mxu0 0.0
    %1491 = vmatprep.subr.mxu0 0.0
    %1492 = vmatpush1.xpose.msra.mxu0 0.0
    %1493 = vmatprep.subr.mxu0 0.0
    %1494 = vmatpush1.xpose.msra.mxu0 0.0
    %1495 = vmatprep.subr.mxu0 0.0
    %1496 = vmatpush1.xpose.msra.mxu0 0.0
    %1497 = vmatprep.subr.mxu0 0.0
    %1498 = vmatpush1.xpose.msra.mxu0 0.0
    %1499 = vmatprep.subr.mxu0 0.0
    %1500 = vmatpush1.xpose.msra.mxu0 0.0
    %1501 = vmatprep.subr.mxu0 0.0
    %1502 = vmatpush1.xpose.msra.mxu0 0.0
    %1503 = vmatprep.subr.mxu0 0.0
    %1504 = vmatpush1.xpose.msra.mxu0 0.0
    %1505 = vmatprep.subr.mxu0 0.0
    %1506 = vmatpush1.xpose.msra.mxu0 0.0
    %1507 = vmatprep.subr.mxu0 0.0
    %1508 = vmatpush1.xpose.msra.mxu0 0.0
    %1509 = vmatprep.subr.mxu0 0.0
    %1510 = vmatpush1.xpose.msra.mxu0 0.0
    %1511 = vmatprep.subr.mxu0 0.0
    %1512 = vmatpush1.xpose.msra.mxu0 0.0
    %1513 = vmatprep.subr.mxu0 0.0
    %1514 = vmatpush1.xpose.msra.mxu0 0.0
    %1515 = vmatprep.subr.mxu0 0.0
    %1516 = vmatpush1.xpose.msra.mxu0 0.0
    %1517 = vmatprep.mubr.f32.mxu0 0.0
    %1518 = vmatmul.mubr.f32.gmra.mrb[0].mxu0 %v1403
    %v1519 = vpop.f32.mrb[0].mxu0
    %v1520 = vadd.f32 %v1400, %v1519
    %v1521 = vpop.f32.mrb[0].mxu0
    %1522 = vdwg.mxu0
    %v1523 = vlaneseq
    %vm1524 = vcmp.ge.s32.totalorder %v1523, 0
    %vm1525 = vcmp.lt.s32.totalorder %v1523, 128
    %vm1526 = vmand %vm1524, %vm1525
    %1527 = vst.msk [vmem:[#allocation6] sm:$0x1] %vm1526, %v1520
    %v1528 = vld [vmem:[#allocation3 + $0x180] sm:$0xff]
    %v1529 = vld [vmem:[#allocation3 + $0x188] sm:$0xff]
    %v1530 = vld [vmem:[#allocation3 + $0x190] sm:$0xff]
    %v1531 = vld [vmem:[#allocation3 + $0x198] sm:$0xff]
    %v1532 = vld [vmem:[#allocation3 + $0x1a0] sm:$0xff]
    %v1533 = vld [vmem:[#allocation3 + $0x1a8] sm:$0xff]
    %v1534 = vld [vmem:[#allocation3 + $0x1b0] sm:$0xff]
    %v1535 = vld [vmem:[#allocation3 + $0x1b8] sm:$0xff]
    %v1536 = vld [vmem:[#allocation3 + $0x1c0] sm:$0xff]
    %v1537 = vld [vmem:[#allocation3 + $0x1c8] sm:$0xff]
    %v1538 = vld [vmem:[#allocation3 + $0x1d0] sm:$0xff]
    %v1539 = vld [vmem:[#allocation3 + $0x1d8] sm:$0xff]
    %v1540 = vld [vmem:[#allocation3 + $0x1e0] sm:$0xff]
    %v1541 = vld [vmem:[#allocation3 + $0x1e8] sm:$0xff]
    %v1542 = vld [vmem:[#allocation3 + $0x1f0] sm:$0xff]
    %v1543 = vld [vmem:[#allocation3 + $0x1f8] sm:$0xff]
    %v1544 = vld [vmem:[#allocation3 + $0x200] sm:$0xff]
    %v1545 = vld [vmem:[#allocation3 + $0x208] sm:$0xff]
    %v1546 = vld [vmem:[#allocation3 + $0x210] sm:$0xff]
    %v1547 = vld [vmem:[#allocation3 + $0x218] sm:$0xff]
    %v1548 = vld [vmem:[#allocation3 + $0x220] sm:$0xff]
    %v1549 = vld [vmem:[#allocation3 + $0x228] sm:$0xff]
    %v1550 = vld [vmem:[#allocation3 + $0x230] sm:$0xff]
    %v1551 = vld [vmem:[#allocation3 + $0x238] sm:$0xff]
    %v1552 = vld [vmem:[#allocation3 + $0x240] sm:$0xff]
    %v1553 = vld [vmem:[#allocation3 + $0x248] sm:$0xff]
    %v1554 = vld [vmem:[#allocation3 + $0x250] sm:$0xff]
    %v1555 = vld [vmem:[#allocation3 + $0x258] sm:$0xff]
    %v1556 = vld [vmem:[#allocation3 + $0x260] sm:$0xff]
    %v1557 = vld [vmem:[#allocation3 + $0x268] sm:$0xff]
    %v1558 = vld [vmem:[#allocation3 + $0x270] sm:$0xff]
    %v1559 = vld [vmem:[#allocation3 + $0x278] sm:$0xff]
    %v1560 = vld [vmem:[#allocation3 + $0x280] sm:$0xff]
    %v1561 = vld [vmem:[#allocation3 + $0x288] sm:$0xff]
    %v1562 = vld [vmem:[#allocation3 + $0x290] sm:$0xff]
    %v1563 = vld [vmem:[#allocation3 + $0x298] sm:$0xff]
    %v1564 = vld [vmem:[#allocation3 + $0x2a0] sm:$0xff]
    %v1565 = vld [vmem:[#allocation3 + $0x2a8] sm:$0xff]
    %v1566 = vld [vmem:[#allocation3 + $0x2b0] sm:$0xff]
    %v1567 = vld [vmem:[#allocation3 + $0x2b8] sm:$0xff]
    %v1568 = vld [vmem:[#allocation3 + $0x2c0] sm:$0xff]
    %v1569 = vld [vmem:[#allocation3 + $0x2c8] sm:$0xff]
    %v1570 = vld [vmem:[#allocation3 + $0x2d0] sm:$0xff]
    %v1571 = vld [vmem:[#allocation3 + $0x2d8] sm:$0xff]
    %v1572 = vld [vmem:[#allocation3 + $0x2e0] sm:$0xff]
    %v1573 = vld [vmem:[#allocation3 + $0x2e8] sm:$0xff]
    %v1574 = vld [vmem:[#allocation3 + $0x2f0] sm:$0xff]
    %v1575 = vld [vmem:[#allocation3 + $0x2f8] sm:$0xff]
    %v1624 = vunpack.c.l.b16 %v1528
    %v1625 = vunpack.c.h.b16 %v1528
    %v1626 = vunpack.c.l.b16 %v1529
    %v1627 = vunpack.c.h.b16 %v1529
    %v1628 = vunpack.c.l.b16 %v1530
    %v1629 = vunpack.c.h.b16 %v1530
    %v1630 = vunpack.c.l.b16 %v1531
    %v1631 = vunpack.c.h.b16 %v1531
    %v1632 = vunpack.c.l.b16 %v1532
    %v1633 = vunpack.c.h.b16 %v1532
    %v1634 = vunpack.c.l.b16 %v1533
    %v1635 = vunpack.c.h.b16 %v1533
    %v1636 = vunpack.c.l.b16 %v1534
    %v1637 = vunpack.c.h.b16 %v1534
    %v1638 = vunpack.c.l.b16 %v1535
    %v1639 = vunpack.c.h.b16 %v1535
    %v1640 = vunpack.c.l.b16 %v1536
    %v1641 = vunpack.c.h.b16 %v1536
    %v1642 = vunpack.c.l.b16 %v1537
    %v1643 = vunpack.c.h.b16 %v1537
    %v1644 = vunpack.c.l.b16 %v1538
    %v1645 = vunpack.c.h.b16 %v1538
    %v1646 = vunpack.c.l.b16 %v1539
    %v1647 = vunpack.c.h.b16 %v1539
    %v1648 = vunpack.c.l.b16 %v1540
    %v1649 = vunpack.c.h.b16 %v1540
    %v1650 = vunpack.c.l.b16 %v1541
    %v1651 = vunpack.c.h.b16 %v1541
    %v1652 = vunpack.c.l.b16 %v1542
    %v1653 = vunpack.c.h.b16 %v1542
    %v1654 = vunpack.c.l.b16 %v1543
    %v1655 = vunpack.c.h.b16 %v1543
    %v1656 = vunpack.c.l.b16 %v1544
    %v1657 = vunpack.c.h.b16 %v1544
    %v1658 = vunpack.c.l.b16 %v1545
    %v1659 = vunpack.c.h.b16 %v1545
    %v1660 = vunpack.c.l.b16 %v1546
    %v1661 = vunpack.c.h.b16 %v1546
    %v1662 = vunpack.c.l.b16 %v1547
    %v1663 = vunpack.c.h.b16 %v1547
    %v1664 = vunpack.c.l.b16 %v1548
    %v1665 = vunpack.c.h.b16 %v1548
    %v1666 = vunpack.c.l.b16 %v1549
    %v1667 = vunpack.c.h.b16 %v1549
    %v1668 = vunpack.c.l.b16 %v1550
    %v1669 = vunpack.c.h.b16 %v1550
    %v1670 = vunpack.c.l.b16 %v1551
    %v1671 = vunpack.c.h.b16 %v1551
    %v1672 = vunpack.c.l.b16 %v1552
    %v1673 = vunpack.c.h.b16 %v1552
    %v1674 = vunpack.c.l.b16 %v1553
    %v1675 = vunpack.c.h.b16 %v1553
    %v1676 = vunpack.c.l.b16 %v1554
    %v1677 = vunpack.c.h.b16 %v1554
    %v1678 = vunpack.c.l.b16 %v1555
    %v1679 = vunpack.c.h.b16 %v1555
    %v1680 = vunpack.c.l.b16 %v1556
    %v1681 = vunpack.c.h.b16 %v1556
    %v1682 = vunpack.c.l.b16 %v1557
    %v1683 = vunpack.c.h.b16 %v1557
    %v1684 = vunpack.c.l.b16 %v1558
    %v1685 = vunpack.c.h.b16 %v1558
    %v1686 = vunpack.c.l.b16 %v1559
    %v1687 = vunpack.c.h.b16 %v1559
    %v1688 = vunpack.c.l.b16 %v1560
    %v1689 = vunpack.c.h.b16 %v1560
    %v1690 = vunpack.c.l.b16 %v1561
    %v1691 = vunpack.c.h.b16 %v1561
    %v1692 = vunpack.c.l.b16 %v1562
    %v1693 = vunpack.c.h.b16 %v1562
    %v1694 = vunpack.c.l.b16 %v1563
    %v1695 = vunpack.c.h.b16 %v1563
    %v1696 = vunpack.c.l.b16 %v1564
    %v1697 = vunpack.c.h.b16 %v1564
    %v1698 = vunpack.c.l.b16 %v1565
    %v1699 = vunpack.c.h.b16 %v1565
    %v1700 = vunpack.c.l.b16 %v1566
    %v1701 = vunpack.c.h.b16 %v1566
    %v1702 = vunpack.c.l.b16 %v1567
    %v1703 = vunpack.c.h.b16 %v1567
    %v1704 = vunpack.c.l.b16 %v1568
    %v1705 = vunpack.c.h.b16 %v1568
    %v1706 = vunpack.c.l.b16 %v1569
    %v1707 = vunpack.c.h.b16 %v1569
    %v1708 = vunpack.c.l.b16 %v1570
    %v1709 = vunpack.c.h.b16 %v1570
    %v1710 = vunpack.c.l.b16 %v1571
    %v1711 = vunpack.c.h.b16 %v1571
    %v1712 = vunpack.c.l.b16 %v1572
    %v1713 = vunpack.c.h.b16 %v1572
    %v1714 = vunpack.c.l.b16 %v1573
    %v1715 = vunpack.c.h.b16 %v1573
    %v1716 = vunpack.c.l.b16 %v1574
    %v1717 = vunpack.c.h.b16 %v1574
    %v1718 = vunpack.c.l.b16 %v1575
    %v1719 = vunpack.c.h.b16 %v1575
    %v1720 = vpack.c.b16 %v1630, %v1624
    %v1721 = vpack.c.b16 %v1631, %v1625
    %v1722 = vpack.c.b16 %v1632, %v1626
    %v1723 = vpack.c.b16 %v1633, %v1627
    %v1724 = vpack.c.b16 %v1634, %v1628
    %v1725 = vpack.c.b16 %v1635, %v1629
    %v1726 = vpack.c.b16 %v1642, %v1636
    %v1727 = vpack.c.b16 %v1643, %v1637
    %v1728 = vpack.c.b16 %v1644, %v1638
    %v1729 = vpack.c.b16 %v1645, %v1639
    %v1730 = vpack.c.b16 %v1646, %v1640
    %v1731 = vpack.c.b16 %v1647, %v1641
    %v1732 = vpack.c.b16 %v1654, %v1648
    %v1733 = vpack.c.b16 %v1655, %v1649
    %v1734 = vpack.c.b16 %v1656, %v1650
    %v1735 = vpack.c.b16 %v1657, %v1651
    %v1736 = vpack.c.b16 %v1658, %v1652
    %v1737 = vpack.c.b16 %v1659, %v1653
    %v1738 = vpack.c.b16 %v1666, %v1660
    %v1739 = vpack.c.b16 %v1667, %v1661
    %v1740 = vpack.c.b16 %v1668, %v1662
    %v1741 = vpack.c.b16 %v1669, %v1663
    %v1742 = vpack.c.b16 %v1670, %v1664
    %v1743 = vpack.c.b16 %v1671, %v1665
    %v1744 = vpack.c.b16 %v1678, %v1672
    %v1745 = vpack.c.b16 %v1679, %v1673
    %v1746 = vpack.c.b16 %v1680, %v1674
    %v1747 = vpack.c.b16 %v1681, %v1675
    %v1748 = vpack.c.b16 %v1682, %v1676
    %v1749 = vpack.c.b16 %v1683, %v1677
    %v1750 = vpack.c.b16 %v1690, %v1684
    %v1751 = vpack.c.b16 %v1691, %v1685
    %v1752 = vpack.c.b16 %v1692, %v1686
    %v1753 = vpack.c.b16 %v1693, %v1687
    %v1754 = vpack.c.b16 %v1694, %v1688
    %v1755 = vpack.c.b16 %v1695, %v1689
    %v1756 = vpack.c.b16 %v1702, %v1696
    %v1757 = vpack.c.b16 %v1703, %v1697
    %v1758 = vpack.c.b16 %v1704, %v1698
    %v1759 = vpack.c.b16 %v1705, %v1699
    %v1760 = vpack.c.b16 %v1706, %v1700
    %v1761 = vpack.c.b16 %v1707, %v1701
    %v1762 = vpack.c.b16 %v1714, %v1708
    %v1763 = vpack.c.b16 %v1715, %v1709
    %v1764 = vpack.c.b16 %v1716, %v1710
    %v1765 = vpack.c.b16 %v1717, %v1711
    %v1766 = vpack.c.b16 %v1718, %v1712
    %v1767 = vpack.c.b16 %v1719, %v1713
    %1816 = vmatprep.subr.bf16.mxu0 0
    %1817 = vmatpush1.bf16.msra.mxu0 %v649
    %1818 = vmatprep.subr.bf16.mxu0 0
    %1819 = vmatpush1.bf16.msra.mxu0 %v650
    %1820 = vmatprep.subr.bf16.mxu0 0
    %1821 = vmatpush1.bf16.msra.mxu0 %v651
    %1822 = vmatprep.subr.bf16.mxu0 0
    %1823 = vmatpush1.bf16.msra.mxu0 %v652
    %1824 = vmatprep.subr.bf16.mxu0 0
    %1825 = vmatpush1.bf16.msra.mxu0 %v653
    %1826 = vmatprep.subr.bf16.mxu0 0
    %1827 = vmatpush1.bf16.msra.mxu0 %v654
    %1828 = vmatprep.subr.bf16.mxu0 0
    %1829 = vmatpush1.bf16.msra.mxu0 %v655
    %1830 = vmatprep.subr.bf16.mxu0 0
    %1831 = vmatpush1.bf16.msra.mxu0 %v656
    %1832 = vmatprep.subr.bf16.mxu0 0
    %1833 = vmatpush1.bf16.msra.mxu0 %v657
    %1834 = vmatprep.subr.bf16.mxu0 0
    %1835 = vmatpush1.bf16.msra.mxu0 %v658
    %1836 = vmatprep.subr.bf16.mxu0 0
    %1837 = vmatpush1.bf16.msra.mxu0 %v659
    %1838 = vmatprep.subr.bf16.mxu0 0
    %1839 = vmatpush1.bf16.msra.mxu0 %v660
    %1840 = vmatprep.subr.bf16.mxu0 0
    %1841 = vmatpush1.bf16.msra.mxu0 %v661
    %1842 = vmatprep.subr.bf16.mxu0 0
    %1843 = vmatpush1.bf16.msra.mxu0 %v662
    %1844 = vmatprep.subr.bf16.mxu0 0
    %1845 = vmatpush1.bf16.msra.mxu0 %v663
    %1846 = vmatprep.subr.bf16.mxu0 0
    %1847 = vmatpush1.bf16.msra.mxu0 %v664
    %1848 = vmatprep.mubr.bf16.mxu0 %v1721
    %1849 = vmatmul.mubr.bf16.gmra.mrb[0].mxu0 %v1720
    %v1850 = vpop.f32.mrb[0].mxu0
    %v1851 = vadd.f32 %v215, %v1850
    %v1852 = vpop.f32.mrb[0].mxu0
    %v1853 = vpop.f32.mrb[0].mxu0
    %v1854 = vadd.f32 %v215, %v1853
    %v1855 = vpop.f32.mrb[0].mxu0
    %1856 = vmatprep.mubr.bf16.mxu0 %v1727
    %1857 = vmatmul.mubr.bf16.gmra.mrb[0].mxu0 %v1726
    %v1858 = vpop.f32.mrb[0].mxu0
    %v1859 = vadd.f32 %v215, %v1858
    %v1860 = vpop.f32.mrb[0].mxu0
    %v1861 = vpop.f32.mrb[0].mxu0
    %v1862 = vadd.f32 %v215, %v1861
    %v1863 = vpop.f32.mrb[0].mxu0
    %1864 = vmatprep.mubr.bf16.mxu0 %v1733
    %1865 = vmatmul.mubr.bf16.gmra.mrb[0].mxu0 %v1732
    %v1866 = vpop.f32.mrb[0].mxu0
    %v1867 = vadd.f32 %v215, %v1866
    %v1868 = vpop.f32.mrb[0].mxu0
    %v1869 = vpop.f32.mrb[0].mxu0
    %v1870 = vadd.f32 %v215, %v1869
    %v1871 = vpop.f32.mrb[0].mxu0
    %1872 = vmatprep.mubr.bf16.mxu0 %v1739
    %1873 = vmatmul.mubr.bf16.gmra.mrb[0].mxu0 %v1738
    %v1874 = vpop.f32.mrb[0].mxu0
    %v1875 = vadd.f32 %v215, %v1874
    %v1876 = vpop.f32.mrb[0].mxu0
    %v1877 = vpop.f32.mrb[0].mxu0
    %v1878 = vadd.f32 %v215, %v1877
    %v1879 = vpop.f32.mrb[0].mxu0
    %1880 = vmatprep.mubr.bf16.mxu0 %v1745
    %1881 = vmatmul.mubr.bf16.gmra.mrb[0].mxu0 %v1744
    %v1882 = vpop.f32.mrb[0].mxu0
    %v1883 = vadd.f32 %v215, %v1882
    %v1884 = vpop.f32.mrb[0].mxu0
    %v1885 = vpop.f32.mrb[0].mxu0
    %v1886 = vadd.f32 %v215, %v1885
    %v1887 = vpop.f32.mrb[0].mxu0
    %1888 = vmatprep.mubr.bf16.mxu0 %v1751
    %1889 = vmatmul.mubr.bf16.gmra.mrb[0].mxu0 %v1750
    %v1890 = vpop.f32.mrb[0].mxu0
    %v1891 = vadd.f32 %v215, %v1890
    %v1892 = vpop.f32.mrb[0].mxu0
    %v1893 = vpop.f32.mrb[0].mxu0
    %v1894 = vadd.f32 %v215, %v1893
    %v1895 = vpop.f32.mrb[0].mxu0
    %1896 = vmatprep.mubr.bf16.mxu0 %v1757
    %1897 = vmatmul.mubr.bf16.gmra.mrb[0].mxu0 %v1756
    %v1898 = vpop.f32.mrb[0].mxu0
    %v1899 = vadd.f32 %v215, %v1898
    %v1900 = vpop.f32.mrb[0].mxu0
    %v1901 = vpop.f32.mrb[0].mxu0
    %v1902 = vadd.f32 %v215, %v1901
    %v1903 = vpop.f32.mrb[0].mxu0
    %1904 = vmatprep.mubr.bf16.mxu0 %v1763
    %1905 = vmatmul.mubr.bf16.gmra.mrb[0].mxu0 %v1762
    %v1906 = vpop.f32.mrb[0].mxu0
    %v1907 = vadd.f32 %v215, %v1906
    %v1908 = vpop.f32.mrb[0].mxu0
    %v1909 = vpop.f32.mrb[0].mxu0
    %v1910 = vadd.f32 %v215, %v1909
    %v1911 = vpop.f32.mrb[0].mxu0
    %1912 = vdwg.mxu0
    %1913 = vmatprep.subr.bf16.mxu0 0
    %1914 = vmatpush1.bf16.msra.mxu0 %v665
    %1915 = vmatprep.subr.bf16.mxu0 0
    %1916 = vmatpush1.bf16.msra.mxu0 %v666
    %1917 = vmatprep.subr.bf16.mxu0 0
    %1918 = vmatpush1.bf16.msra.mxu0 %v667
    %1919 = vmatprep.subr.bf16.mxu0 0
    %1920 = vmatpush1.bf16.msra.mxu0 %v668
    %1921 = vmatprep.subr.bf16.mxu0 0
    %1922 = vmatpush1.bf16.msra.mxu0 %v669
    %1923 = vmatprep.subr.bf16.mxu0 0
    %1924 = vmatpush1.bf16.msra.mxu0 %v670
    %1925 = vmatprep.subr.bf16.mxu0 0
    %1926 = vmatpush1.bf16.msra.mxu0 %v671
    %1927 = vmatprep.subr.bf16.mxu0 0
    %1928 = vmatpush1.bf16.msra.mxu0 %v672
    %1929 = vmatprep.subr.bf16.mxu0 0
    %1930 = vmatpush1.bf16.msra.mxu0 %v673
    %1931 = vmatprep.subr.bf16.mxu0 0
    %1932 = vmatpush1.bf16.msra.mxu0 %v674
    %1933 = vmatprep.subr.bf16.mxu0 0
    %1934 = vmatpush1.bf16.msra.mxu0 %v675
    %1935 = vmatprep.subr.bf16.mxu0 0
    %1936 = vmatpush1.bf16.msra.mxu0 %v676
    %1937 = vmatprep.subr.bf16.mxu0 0
    %1938 = vmatpush1.bf16.msra.mxu0 %v677
    %1939 = vmatprep.subr.bf16.mxu0 0
    %1940 = vmatpush1.bf16.msra.mxu0 %v678
    %1941 = vmatprep.subr.bf16.mxu0 0
    %1942 = vmatpush1.bf16.msra.mxu0 %v679
    %1943 = vmatprep.subr.bf16.mxu0 0
    %1944 = vmatpush1.bf16.msra.mxu0 %v680
    %1945 = vmatprep.mubr.bf16.mxu0 %v1723
    %1946 = vmatmul.mubr.bf16.gmra.mrb[0].mxu0 %v1722
    %v1947 = vpop.f32.mrb[0].mxu0
    %v1948 = vadd.f32 %v1851, %v1947
    %v1949 = vpop.f32.mrb[0].mxu0
    %v1950 = vpop.f32.mrb[0].mxu0
    %v1951 = vadd.f32 %v1854, %v1950
    %v1952 = vpop.f32.mrb[0].mxu0
    %1953 = vmatprep.mubr.bf16.mxu0 %v1729
    %1954 = vmatmul.mubr.bf16.gmra.mrb[0].mxu0 %v1728
    %v1955 = vpop.f32.mrb[0].mxu0
    %v1956 = vadd.f32 %v1859, %v1955
    %v1957 = vpop.f32.mrb[0].mxu0
    %v1958 = vpop.f32.mrb[0].mxu0
    %v1959 = vadd.f32 %v1862, %v1958
    %v1960 = vpop.f32.mrb[0].mxu0
    %1961 = vmatprep.mubr.bf16.mxu0 %v1735
    %1962 = vmatmul.mubr.bf16.gmra.mrb[0].mxu0 %v1734
    %v1963 = vpop.f32.mrb[0].mxu0
    %v1964 = vadd.f32 %v1867, %v1963
    %v1965 = vpop.f32.mrb[0].mxu0
    %v1966 = vpop.f32.mrb[0].mxu0
    %v1967 = vadd.f32 %v1870, %v1966
    %v1968 = vpop.f32.mrb[0].mxu0
    %1969 = vmatprep.mubr.bf16.mxu0 %v1741
    %1970 = vmatmul.mubr.bf16.gmra.mrb[0].mxu0 %v1740
    %v1971 = vpop.f32.mrb[0].mxu0
    %v1972 = vadd.f32 %v1875, %v1971
    %v1973 = vpop.f32.mrb[0].mxu0
    %v1974 = vpop.f32.mrb[0].mxu0
    %v1975 = vadd.f32 %v1878, %v1974
    %v1976 = vpop.f32.mrb[0].mxu0
    %1977 = vmatprep.mubr.bf16.mxu0 %v1747
    %1978 = vmatmul.mubr.bf16.gmra.mrb[0].mxu0 %v1746
    %v1979 = vpop.f32.mrb[0].mxu0
    %v1980 = vadd.f32 %v1883, %v1979
    %v1981 = vpop.f32.mrb[0].mxu0
    %v1982 = vpop.f32.mrb[0].mxu0
    %v1983 = vadd.f32 %v1886, %v1982
    %v1984 = vpop.f32.mrb[0].mxu0
    %1985 = vmatprep.mubr.bf16.mxu0 %v1753
    %1986 = vmatmul.mubr.bf16.gmra.mrb[0].mxu0 %v1752
    %v1987 = vpop.f32.mrb[0].mxu0
    %v1988 = vadd.f32 %v1891, %v1987
    %v1989 = vpop.f32.mrb[0].mxu0
    %v1990 = vpop.f32.mrb[0].mxu0
    %v1991 = vadd.f32 %v1894, %v1990
    %v1992 = vpop.f32.mrb[0].mxu0
    %1993 = vmatprep.mubr.bf16.mxu0 %v1759
    %1994 = vmatmul.mubr.bf16.gmra.mrb[0].mxu0 %v1758
    %v1995 = vpop.f32.mrb[0].mxu0
    %v1996 = vadd.f32 %v1899, %v1995
    %v1997 = vpop.f32.mrb[0].mxu0
    %v1998 = vpop.f32.mrb[0].mxu0
    %v1999 = vadd.f32 %v1902, %v1998
    %v2000 = vpop.f32.mrb[0].mxu0
    %2001 = vmatprep.mubr.bf16.mxu0 %v1765
    %2002 = vmatmul.mubr.bf16.gmra.mrb[0].mxu0 %v1764
    %v2003 = vpop.f32.mrb[0].mxu0
    %v2004 = vadd.f32 %v1907, %v2003
    %v2005 = vpop.f32.mrb[0].mxu0
    %v2006 = vpop.f32.mrb[0].mxu0
    %v2007 = vadd.f32 %v1910, %v2006
    %v2008 = vpop.f32.mrb[0].mxu0
    %2009 = vdwg.mxu0
    %2010 = vmatprep.subr.bf16.mxu0 0
    %2011 = vmatpush1.bf16.msra.mxu0 %v681
    %2012 = vmatprep.subr.bf16.mxu0 0
    %2013 = vmatpush1.bf16.msra.mxu0 %v682
    %2014 = vmatprep.subr.bf16.mxu0 0
    %2015 = vmatpush1.bf16.msra.mxu0 %v683
    %2016 = vmatprep.subr.bf16.mxu0 0
    %2017 = vmatpush1.bf16.msra.mxu0 %v684
    %2018 = vmatprep.subr.bf16.mxu0 0
    %2019 = vmatpush1.bf16.msra.mxu0 %v685
    %2020 = vmatprep.subr.bf16.mxu0 0
    %2021 = vmatpush1.bf16.msra.mxu0 %v686
    %2022 = vmatprep.subr.bf16.mxu0 0
    %2023 = vmatpush1.bf16.msra.mxu0 %v687
    %2024 = vmatprep.subr.bf16.mxu0 0
    %2025 = vmatpush1.bf16.msra.mxu0 %v688
    %2026 = vmatprep.subr.bf16.mxu0 0
    %2027 = vmatpush1.bf16.msra.mxu0 %v689
    %2028 = vmatprep.subr.bf16.mxu0 0
    %2029 = vmatpush1.bf16.msra.mxu0 %v690
    %2030 = vmatprep.subr.bf16.mxu0 0
    %2031 = vmatpush1.bf16.msra.mxu0 %v691
    %2032 = vmatprep.subr.bf16.mxu0 0
    %2033 = vmatpush1.bf16.msra.mxu0 %v692
    %2034 = vmatprep.subr.bf16.mxu0 0
    %2035 = vmatpush1.bf16.msra.mxu0 %v693
    %2036 = vmatprep.subr.bf16.mxu0 0
    %2037 = vmatpush1.bf16.msra.mxu0 %v694
    %2038 = vmatprep.subr.bf16.mxu0 0
    %2039 = vmatpush1.bf16.msra.mxu0 %v695
    %2040 = vmatprep.subr.bf16.mxu0 0
    %2041 = vmatpush1.bf16.msra.mxu0 %v696
    %2042 = vmatprep.mubr.bf16.mxu0 %v1725
    %2043 = vmatmul.mubr.bf16.gmra.mrb[0].mxu0 %v1724
    %v2044 = vpop.f32.mrb[0].mxu0
    %v2045 = vadd.f32 %v1948, %v2044
    %v2046 = vpop.f32.mrb[0].mxu0
    %v2047 = vpop.f32.mrb[0].mxu0
    %v2048 = vadd.f32 %v1951, %v2047
    %v2049 = vpop.f32.mrb[0].mxu0
    %2050 = vmatprep.mubr.bf16.mxu0 %v1731
    %2051 = vmatmul.mubr.bf16.gmra.mrb[0].mxu0 %v1730
    %v2052 = vpop.f32.mrb[0].mxu0
    %v2053 = vadd.f32 %v1956, %v2052
    %v2054 = vpop.f32.mrb[0].mxu0
    %v2055 = vpop.f32.mrb[0].mxu0
    %v2056 = vadd.f32 %v1959, %v2055
    %v2057 = vpop.f32.mrb[0].mxu0
    %2058 = vmatprep.mubr.bf16.mxu0 %v1737
    %2059 = vmatmul.mubr.bf16.gmra.mrb[0].mxu0 %v1736
    %v2060 = vpop.f32.mrb[0].mxu0
    %v2061 = vadd.f32 %v1964, %v2060
    %v2062 = vpop.f32.mrb[0].mxu0
    %v2063 = vpop.f32.mrb[0].mxu0
    %v2064 = vadd.f32 %v1967, %v2063
    %v2065 = vpop.f32.mrb[0].mxu0
    %2066 = vmatprep.mubr.bf16.mxu0 %v1743
    %2067 = vmatmul.mubr.bf16.gmra.mrb[0].mxu0 %v1742
    %v2068 = vpop.f32.mrb[0].mxu0
    %v2069 = vadd.f32 %v1972, %v2068
    %v2070 = vpop.f32.mrb[0].mxu0
    %v2071 = vpop.f32.mrb[0].mxu0
    %v2072 = vadd.f32 %v1975, %v2071
    %v2073 = vpop.f32.mrb[0].mxu0
    %2074 = vmatprep.mubr.bf16.mxu0 %v1749
    %2075 = vmatmul.mubr.bf16.gmra.mrb[0].mxu0 %v1748
    %v2076 = vpop.f32.mrb[0].mxu0
    %v2077 = vadd.f32 %v1980, %v2076
    %v2078 = vpop.f32.mrb[0].mxu0
    %v2079 = vpop.f32.mrb[0].mxu0
    %v2080 = vadd.f32 %v1983, %v2079
    %v2081 = vpop.f32.mrb[0].mxu0
    %2082 = vmatprep.mubr.bf16.mxu0 %v1755
    %2083 = vmatmul.mubr.bf16.gmra.mrb[0].mxu0 %v1754
    %v2084 = vpop.f32.mrb[0].mxu0
    %v2085 = vadd.f32 %v1988, %v2084
    %v2086 = vpop.f32.mrb[0].mxu0
    %v2087 = vpop.f32.mrb[0].mxu0
    %v2088 = vadd.f32 %v1991, %v2087
    %v2089 = vpop.f32.mrb[0].mxu0
    %2090 = vmatprep.mubr.bf16.mxu0 %v1761
    %2091 = vmatmul.mubr.bf16.gmra.mrb[0].mxu0 %v1760
    %v2092 = vpop.f32.mrb[0].mxu0
    %v2093 = vadd.f32 %v1996, %v2092
    %v2094 = vpop.f32.mrb[0].mxu0
    %v2095 = vpop.f32.mrb[0].mxu0
    %v2096 = vadd.f32 %v1999, %v2095
    %v2097 = vpop.f32.mrb[0].mxu0
    %2098 = vmatprep.mubr.bf16.mxu0 %v1767
    %2099 = vmatmul.mubr.bf16.gmra.mrb[0].mxu0 %v1766
    %v2100 = vpop.f32.mrb[0].mxu0
    %v2101 = vadd.f32 %v2004, %v2100
    %v2102 = vpop.f32.mrb[0].mxu0
    %v2103 = vpop.f32.mrb[0].mxu0
    %v2104 = vadd.f32 %v2007, %v2103
    %v2105 = vpop.f32.mrb[0].mxu0
    %2106 = vdwg.mxu0
    %v2107 = vmax.f32 %v2045, 0.0
    %v2108 = vmax.f32 %v2048, 0.0
    %v2109 = vmax.f32 %v2053, 0.0
    %v2110 = vmax.f32 %v2056, 0.0
    %v2111 = vmax.f32 %v2061, 0.0
    %v2112 = vmax.f32 %v2064, 0.0
    %v2113 = vmax.f32 %v2069, 0.0
    %v2114 = vmax.f32 %v2072, 0.0
    %v2115 = vmax.f32 %v2077, 0.0
    %v2116 = vmax.f32 %v2080, 0.0
    %v2117 = vmax.f32 %v2085, 0.0
    %v2118 = vmax.f32 %v2088, 0.0
    %v2119 = vmax.f32 %v2093, 0.0
    %v2120 = vmax.f32 %v2096, 0.0
    %v2121 = vmax.f32 %v2101, 0.0
    %v2122 = vmax.f32 %v2104, 0.0
    %v2123 = vpack.c.bf16 %v2108, %v2107
    %v2124 = vpack.c.bf16 %v2110, %v2109
    %v2125 = vpack.c.bf16 %v2112, %v2111
    %v2126 = vpack.c.bf16 %v2114, %v2113
    %v2127 = vpack.c.bf16 %v2116, %v2115
    %v2128 = vpack.c.bf16 %v2118, %v2117
    %v2129 = vpack.c.bf16 %v2120, %v2119
    %v2130 = vpack.c.bf16 %v2122, %v2121
    %v2132 = vsel %vm1090, %v2123, 0
    %v2135 = vsel %vm1090, %v2124, 0
    %v2138 = vsel %vm1090, %v2125, 0
    %v2141 = vsel %vm1090, %v2126, 0
    %v2144 = vsel %vm1090, %v2127, 0
    %v2147 = vsel %vm1090, %v2128, 0
    %v2150 = vsel %vm1090, %v2129, 0
    %v2153 = vsel %vm1090, %v2130, 0
    %2155 = vmatprep.subr.bf16.mxu0 0
    %2156 = vmatpush1.bf16.msra.mxu0 %v1082
    %2157 = vmatprep.subr.bf16.mxu0 0
    %2158 = vmatpush1.bf16.msra.mxu0 %v1083
    %2159 = vmatprep.subr.bf16.mxu0 0
    %2160 = vmatpush1.bf16.msra.mxu0 %v1084
    %2161 = vmatprep.subr.bf16.mxu0 0
    %2162 = vmatpush1.bf16.msra.mxu0 %v1085
    %2163 = vmatprep.subr.bf16.mxu0 0
    %2164 = vmatpush1.bf16.msra.mxu0 0
    %2165 = vmatprep.subr.bf16.mxu0 0
    %2166 = vmatpush1.bf16.msra.mxu0 0
    %2167 = vmatprep.subr.bf16.mxu0 0
    %2168 = vmatpush1.bf16.msra.mxu0 0
    %2169 = vmatprep.subr.bf16.mxu0 0
    %2170 = vmatpush1.bf16.msra.mxu0 0
    %2171 = vmatprep.subr.bf16.mxu0 0
    %2172 = vmatpush1.bf16.msra.mxu0 0
    %2173 = vmatprep.subr.bf16.mxu0 0
    %2174 = vmatpush1.bf16.msra.mxu0 0
    %2175 = vmatprep.subr.bf16.mxu0 0
    %2176 = vmatpush1.bf16.msra.mxu0 0
    %2177 = vmatprep.subr.bf16.mxu0 0
    %2178 = vmatpush1.bf16.msra.mxu0 0
    %2179 = vmatprep.subr.bf16.mxu0 0
    %2180 = vmatpush1.bf16.msra.mxu0 0
    %2181 = vmatprep.subr.bf16.mxu0 0
    %2182 = vmatpush1.bf16.msra.mxu0 0
    %2183 = vmatprep.subr.bf16.mxu0 0
    %2184 = vmatpush1.bf16.msra.mxu0 0
    %2185 = vmatprep.subr.bf16.mxu0 0
    %2186 = vmatpush1.bf16.msra.mxu0 0
    %2187 = vmatprep.mubr.bf16.mxu0 0
    %2188 = vmatmul.mubr.bf16.gmra.mrb[0].mxu0 %v2132
    %v2189 = vpop.f32.mrb[0].mxu0
    %v2190 = vadd.f32 %v1064, %v2189
    %v2191 = vpop.f32.mrb[0].mxu0
    %v2192 = vpop.f32.mrb[0].mxu0
    %v2193 = vadd.f32 %v1064, %v2192
    %v2194 = vpop.f32.mrb[0].mxu0
    %2195 = vmatprep.mubr.bf16.mxu0 0
    %2196 = vmatmul.mubr.bf16.gmra.mrb[0].mxu0 %v2135
    %v2197 = vpop.f32.mrb[0].mxu0
    %v2198 = vadd.f32 %v1064, %v2197
    %v2199 = vpop.f32.mrb[0].mxu0
    %v2200 = vpop.f32.mrb[0].mxu0
    %v2201 = vadd.f32 %v1064, %v2200
    %v2202 = vpop.f32.mrb[0].mxu0
    %2203 = vmatprep.mubr.bf16.mxu0 0
    %2204 = vmatmul.mubr.bf16.gmra.mrb[0].mxu0 %v2138
    %v2205 = vpop.f32.mrb[0].mxu0
    %v2206 = vadd.f32 %v1064, %v2205
    %v2207 = vpop.f32.mrb[0].mxu0
    %v2208 = vpop.f32.mrb[0].mxu0
    %v2209 = vadd.f32 %v1064, %v2208
    %v2210 = vpop.f32.mrb[0].mxu0
    %2211 = vmatprep.mubr.bf16.mxu0 0
    %2212 = vmatmul.mubr.bf16.gmra.mrb[0].mxu0 %v2141
    %v2213 = vpop.f32.mrb[0].mxu0
    %v2214 = vadd.f32 %v1064, %v2213
    %v2215 = vpop.f32.mrb[0].mxu0
    %v2216 = vpop.f32.mrb[0].mxu0
    %v2217 = vadd.f32 %v1064, %v2216
    %v2218 = vpop.f32.mrb[0].mxu0
    %2219 = vmatprep.mubr.bf16.mxu0 0
    %2220 = vmatmul.mubr.bf16.gmra.mrb[0].mxu0 %v2144
    %v2221 = vpop.f32.mrb[0].mxu0
    %v2222 = vadd.f32 %v1064, %v2221
    %v2223 = vpop.f32.mrb[0].mxu0
    %v2224 = vpop.f32.mrb[0].mxu0
    %v2225 = vadd.f32 %v1064, %v2224
    %v2226 = vpop.f32.mrb[0].mxu0
    %2227 = vmatprep.mubr.bf16.mxu0 0
    %2228 = vmatmul.mubr.bf16.gmra.mrb[0].mxu0 %v2147
    %v2229 = vpop.f32.mrb[0].mxu0
    %v2230 = vadd.f32 %v1064, %v2229
    %v2231 = vpop.f32.mrb[0].mxu0
    %v2232 = vpop.f32.mrb[0].mxu0
    %v2233 = vadd.f32 %v1064, %v2232
    %v2234 = vpop.f32.mrb[0].mxu0
    %2235 = vmatprep.mubr.bf16.mxu0 0
    %2236 = vmatmul.mubr.bf16.gmra.mrb[0].mxu0 %v2150
    %v2237 = vpop.f32.mrb[0].mxu0
    %v2238 = vadd.f32 %v1064, %v2237
    %v2239 = vpop.f32.mrb[0].mxu0
    %v2240 = vpop.f32.mrb[0].mxu0
    %v2241 = vadd.f32 %v1064, %v2240
    %v2242 = vpop.f32.mrb[0].mxu0
    %2243 = vmatprep.mubr.bf16.mxu0 0
    %2244 = vmatmul.mubr.bf16.gmra.mrb[0].mxu0 %v2153
    %v2245 = vpop.f32.mrb[0].mxu0
    %v2246 = vadd.f32 %v1064, %v2245
    %v2247 = vpop.f32.mrb[0].mxu0
    %v2248 = vpop.f32.mrb[0].mxu0
    %v2249 = vadd.f32 %v1064, %v2248
    %v2250 = vpop.f32.mrb[0].mxu0
    %2251 = vdwg.mxu0
    %v2252 = vmax.f32 %v2190, 0.0
    %v2253 = vmax.f32 %v2193, 0.0
    %v2254 = vmax.f32 %v2198, 0.0
    %v2255 = vmax.f32 %v2201, 0.0
    %v2256 = vmax.f32 %v2206, 0.0
    %v2257 = vmax.f32 %v2209, 0.0
    %v2258 = vmax.f32 %v2214, 0.0
    %v2259 = vmax.f32 %v2217, 0.0
    %v2260 = vmax.f32 %v2222, 0.0
    %v2261 = vmax.f32 %v2225, 0.0
    %v2262 = vmax.f32 %v2230, 0.0
    %v2263 = vmax.f32 %v2233, 0.0
    %v2264 = vmax.f32 %v2238, 0.0
    %v2265 = vmax.f32 %v2241, 0.0
    %v2266 = vmax.f32 %v2246, 0.0
    %v2267 = vmax.f32 %v2249, 0.0
    %v2268 = vpack.c.bf16 %v2253, %v2252
    %v2269 = vpack.c.bf16 %v2255, %v2254
    %v2270 = vpack.c.bf16 %v2257, %v2256
    %v2271 = vpack.c.bf16 %v2259, %v2258
    %v2272 = vpack.c.bf16 %v2261, %v2260
    %v2273 = vpack.c.bf16 %v2263, %v2262
    %v2274 = vpack.c.bf16 %v2265, %v2264
    %v2275 = vpack.c.bf16 %v2267, %v2266
    %v2277 = vsel %vm1254, %v2268, 0
    %v2280 = vsel %vm1254, %v2269, 0
    %v2283 = vsel %vm1254, %v2270, 0
    %v2286 = vsel %vm1254, %v2271, 0
    %v2289 = vsel %vm1254, %v2272, 0
    %v2292 = vsel %vm1254, %v2273, 0
    %v2295 = vsel %vm1254, %v2274, 0
    %v2298 = vsel %vm1254, %v2275, 0
    %2300 = vmatprep.subr.bf16.mxu0 0
    %2301 = vmatpush1.bf16.msra.mxu0 %v1250
    %2302 = vmatprep.subr.bf16.mxu0 0
    %2303 = vmatpush1.bf16.msra.mxu0 %v1251
    %2304 = vmatprep.subr.bf16.mxu0 0
    %2305 = vmatpush1.bf16.msra.mxu0 0
    %2306 = vmatprep.subr.bf16.mxu0 0
    %2307 = vmatpush1.bf16.msra.mxu0 0
    %2308 = vmatprep.subr.bf16.mxu0 0
    %2309 = vmatpush1.bf16.msra.mxu0 0
    %2310 = vmatprep.subr.bf16.mxu0 0
    %2311 = vmatpush1.bf16.msra.mxu0 0
    %2312 = vmatprep.subr.bf16.mxu0 0
    %2313 = vmatpush1.bf16.msra.mxu0 0
    %2314 = vmatprep.subr.bf16.mxu0 0
    %2315 = vmatpush1.bf16.msra.mxu0 0
    %2316 = vmatprep.subr.bf16.mxu0 0
    %2317 = vmatpush1.bf16.msra.mxu0 0
    %2318 = vmatprep.subr.bf16.mxu0 0
    %2319 = vmatpush1.bf16.msra.mxu0 0
    %2320 = vmatprep.subr.bf16.mxu0 0
    %2321 = vmatpush1.bf16.msra.mxu0 0
    %2322 = vmatprep.subr.bf16.mxu0 0
    %2323 = vmatpush1.bf16.msra.mxu0 0
    %2324 = vmatprep.subr.bf16.mxu0 0
    %2325 = vmatpush1.bf16.msra.mxu0 0
    %2326 = vmatprep.subr.bf16.mxu0 0
    %2327 = vmatpush1.bf16.msra.mxu0 0
    %2328 = vmatprep.subr.bf16.mxu0 0
    %2329 = vmatpush1.bf16.msra.mxu0 0
    %2330 = vmatprep.subr.bf16.mxu0 0
    %2331 = vmatpush1.bf16.msra.mxu0 0
    %2332 = vmatprep.mubr.bf16.mxu0 0
    %2333 = vmatmul.mubr.bf16.gmra.mrb[0].mxu0 %v2277
    %v2334 = vpop.f32.mrb[0].mxu0
    %v2335 = vadd.f32 %v1240, %v2334
    %v2336 = vpop.f32.mrb[0].mxu0
    %v2337 = vpop.f32.mrb[0].mxu0
    %v2338 = vadd.f32 %v1240, %v2337
    %v2339 = vpop.f32.mrb[0].mxu0
    %2340 = vmatprep.mubr.bf16.mxu0 0
    %2341 = vmatmul.mubr.bf16.gmra.mrb[0].mxu0 %v2280
    %v2342 = vpop.f32.mrb[0].mxu0
    %v2343 = vadd.f32 %v1240, %v2342
    %v2344 = vpop.f32.mrb[0].mxu0
    %v2345 = vpop.f32.mrb[0].mxu0
    %v2346 = vadd.f32 %v1240, %v2345
    %v2347 = vpop.f32.mrb[0].mxu0
    %2348 = vmatprep.mubr.bf16.mxu0 0
    %2349 = vmatmul.mubr.bf16.gmra.mrb[0].mxu0 %v2283
    %v2350 = vpop.f32.mrb[0].mxu0
    %v2351 = vadd.f32 %v1240, %v2350
    %v2352 = vpop.f32.mrb[0].mxu0
    %v2353 = vpop.f32.mrb[0].mxu0
    %v2354 = vadd.f32 %v1240, %v2353
    %v2355 = vpop.f32.mrb[0].mxu0
    %2356 = vmatprep.mubr.bf16.mxu0 0
    %2357 = vmatmul.mubr.bf16.gmra.mrb[0].mxu0 %v2286
    %v2358 = vpop.f32.mrb[0].mxu0
    %v2359 = vadd.f32 %v1240, %v2358
    %v2360 = vpop.f32.mrb[0].mxu0
    %v2361 = vpop.f32.mrb[0].mxu0
    %v2362 = vadd.f32 %v1240, %v2361
    %v2363 = vpop.f32.mrb[0].mxu0
    %2364 = vmatprep.mubr.bf16.mxu0 0
    %2365 = vmatmul.mubr.bf16.gmra.mrb[0].mxu0 %v2289
    %v2366 = vpop.f32.mrb[0].mxu0
    %v2367 = vadd.f32 %v1240, %v2366
    %v2368 = vpop.f32.mrb[0].mxu0
    %v2369 = vpop.f32.mrb[0].mxu0
    %v2370 = vadd.f32 %v1240, %v2369
    %v2371 = vpop.f32.mrb[0].mxu0
    %2372 = vmatprep.mubr.bf16.mxu0 0
    %2373 = vmatmul.mubr.bf16.gmra.mrb[0].mxu0 %v2292
    %v2374 = vpop.f32.mrb[0].mxu0
    %v2375 = vadd.f32 %v1240, %v2374
    %v2376 = vpop.f32.mrb[0].mxu0
    %v2377 = vpop.f32.mrb[0].mxu0
    %v2378 = vadd.f32 %v1240, %v2377
    %v2379 = vpop.f32.mrb[0].mxu0
    %2380 = vmatprep.mubr.bf16.mxu0 0
    %2381 = vmatmul.mubr.bf16.gmra.mrb[0].mxu0 %v2295
    %v2382 = vpop.f32.mrb[0].mxu0
    %v2383 = vadd.f32 %v1240, %v2382
    %v2384 = vpop.f32.mrb[0].mxu0
    %v2385 = vpop.f32.mrb[0].mxu0
    %v2386 = vadd.f32 %v1240, %v2385
    %v2387 = vpop.f32.mrb[0].mxu0
    %2388 = vmatprep.mubr.bf16.mxu0 0
    %2389 = vmatmul.mubr.bf16.gmra.mrb[0].mxu0 %v2298
    %v2390 = vpop.f32.mrb[0].mxu0
    %v2391 = vadd.f32 %v1240, %v2390
    %v2392 = vpop.f32.mrb[0].mxu0
    %v2393 = vpop.f32.mrb[0].mxu0
    %v2394 = vadd.f32 %v1240, %v2393
    %v2395 = vpop.f32.mrb[0].mxu0
    %2396 = vdwg.mxu0
    %v2397 = vmax.f32 %v2335, 0.0
    %v2398 = vmax.f32 %v2338, 0.0
    %v2399 = vmax.f32 %v2343, 0.0
    %v2400 = vmax.f32 %v2346, 0.0
    %v2401 = vmax.f32 %v2351, 0.0
    %v2402 = vmax.f32 %v2354, 0.0
    %v2403 = vmax.f32 %v2359, 0.0
    %v2404 = vmax.f32 %v2362, 0.0
    %v2405 = vmax.f32 %v2367, 0.0
    %v2406 = vmax.f32 %v2370, 0.0
    %v2407 = vmax.f32 %v2375, 0.0
    %v2408 = vmax.f32 %v2378, 0.0
    %v2409 = vmax.f32 %v2383, 0.0
    %v2410 = vmax.f32 %v2386, 0.0
    %v2411 = vmax.f32 %v2391, 0.0
    %v2412 = vmax.f32 %v2394, 0.0
    %v2414 = vsel %vm1401, %v2397, 0
    %v2417 = vsel %vm1401, %v2398, 0
    %v2420 = vsel %vm1401, %v2399, 0
    %v2423 = vsel %vm1401, %v2400, 0
    %v2426 = vsel %vm1401, %v2401, 0
    %v2429 = vsel %vm1401, %v2402, 0
    %v2432 = vsel %vm1401, %v2403, 0
    %v2435 = vsel %vm1401, %v2404, 0
    %v2438 = vsel %vm1401, %v2405, 0
    %v2441 = vsel %vm1401, %v2406, 0
    %v2444 = vsel %vm1401, %v2407, 0
    %v2447 = vsel %vm1401, %v2408, 0
    %v2450 = vsel %vm1401, %v2409, 0
    %v2453 = vsel %vm1401, %v2410, 0
    %v2456 = vsel %vm1401, %v2411, 0
    %v2459 = vsel %vm1401, %v2412, 0
    %2461 = vmatprep.subr.mxu0 0.0
    %2462 = vmatpush1.xpose.msra.mxu0 %v2414
    %2463 = vmatprep.subr.mxu0 0.0
    %2464 = vmatpush1.xpose.msra.mxu0 %v2417
    %2465 = vmatprep.subr.mxu0 0.0
    %2466 = vmatpush1.xpose.msra.mxu0 %v2420
    %2467 = vmatprep.subr.mxu0 0.0
    %2468 = vmatpush1.xpose.msra.mxu0 %v2423
    %2469 = vmatprep.subr.mxu0 0.0
    %2470 = vmatpush1.xpose.msra.mxu0 %v2426
    %2471 = vmatprep.subr.mxu0 0.0
    %2472 = vmatpush1.xpose.msra.mxu0 %v2429
    %2473 = vmatprep.subr.mxu0 0.0
    %2474 = vmatpush1.xpose.msra.mxu0 %v2432
    %2475 = vmatprep.subr.mxu0 0.0
    %2476 = vmatpush1.xpose.msra.mxu0 %v2435
    %2477 = vmatprep.subr.mxu0 0.0
    %2478 = vmatpush1.xpose.msra.mxu0 %v2438
    %2479 = vmatprep.subr.mxu0 0.0
    %2480 = vmatpush1.xpose.msra.mxu0 %v2441
    %2481 = vmatprep.subr.mxu0 0.0
    %2482 = vmatpush1.xpose.msra.mxu0 %v2444
    %2483 = vmatprep.subr.mxu0 0.0
    %2484 = vmatpush1.xpose.msra.mxu0 %v2447
    %2485 = vmatprep.subr.mxu0 0.0
    %2486 = vmatpush1.xpose.msra.mxu0 %v2450
    %2487 = vmatprep.subr.mxu0 0.0
    %2488 = vmatpush1.xpose.msra.mxu0 %v2453
    %2489 = vmatprep.subr.mxu0 0.0
    %2490 = vmatpush1.xpose.msra.mxu0 %v2456
    %2491 = vmatprep.subr.mxu0 0.0
    %2492 = vmatpush1.xpose.msra.mxu0 %v2459
    %2493 = vmatprep.subr.mxu0 0.0
    %2494 = vmatpush1.xpose.msra.mxu0 0.0
    %2495 = vmatprep.subr.mxu0 0.0
    %2496 = vmatpush1.xpose.msra.mxu0 0.0
    %2497 = vmatprep.subr.mxu0 0.0
    %2498 = vmatpush1.xpose.msra.mxu0 0.0
    %2499 = vmatprep.subr.mxu0 0.0
    %2500 = vmatpush1.xpose.msra.mxu0 0.0
    %2501 = vmatprep.subr.mxu0 0.0
    %2502 = vmatpush1.xpose.msra.mxu0 0.0
    %2503 = vmatprep.subr.mxu0 0.0
    %2504 = vmatpush1.xpose.msra.mxu0 0.0
    %2505 = vmatprep.subr.mxu0 0.0
    %2506 = vmatpush1.xpose.msra.mxu0 0.0
    %2507 = vmatprep.subr.mxu0 0.0
    %2508 = vmatpush1.xpose.msra.mxu0 0.0
    %2509 = vmatprep.subr.mxu0 0.0
    %2510 = vmatpush1.xpose.msra.mxu0 0.0
    %2511 = vmatprep.subr.mxu0 0.0
    %2512 = vmatpush1.xpose.msra.mxu0 0.0
    %2513 = vmatprep.subr.mxu0 0.0
    %2514 = vmatpush1.xpose.msra.mxu0 0.0
    %2515 = vmatprep.subr.mxu0 0.0
    %2516 = vmatpush1.xpose.msra.mxu0 0.0
    %2517 = vmatprep.subr.mxu0 0.0
    %2518 = vmatpush1.xpose.msra.mxu0 0.0
    %2519 = vmatprep.subr.mxu0 0.0
    %2520 = vmatpush1.xpose.msra.mxu0 0.0
    %2521 = vmatprep.subr.mxu0 0.0
    %2522 = vmatpush1.xpose.msra.mxu0 0.0
    %2523 = vmatprep.subr.mxu0 0.0
    %2524 = vmatpush1.xpose.msra.mxu0 0.0
    %2525 = vmatprep.mubr.f32.mxu0 0.0
    %2526 = vmatmul.mubr.f32.gmra.mrb[0].mxu0 %v1403
    %v2527 = vpop.f32.mrb[0].mxu0
    %v2528 = vadd.f32 %v1400, %v2527
    %v2529 = vpop.f32.mrb[0].mxu0
    %2530 = vdwg.mxu0
    %2531 = vst.msk [vmem:[#allocation6 + $0x1] sm:$0x1] %vm1526, %v2528
    // Predicated region
    $region42: #{tpu_custom_call.1} parent=1 // pred_check
      _
    $region43: #{tpu_custom_call.1} parent=1 // pred_check_branch
      %2533 = sbr.rel (0) target = $region45
    $region44: #{tpu_custom_call.1} parent=1 // pred_region
      %s2535 = ssub.s32 32, 32
      %2536 = vsyncadd [#allocation5], %s2535
      %s2538 = sshll.u32 [#allocation6], 4
      %s2539 = int_to_ptr.vmem [resolvable:$true] %s2538
      %2541 = dma.vmem_to_hbm [thread:$0]  %s2539, 32, %s9, [#allocation5]
    $region45: #{tpu_custom_call.1} parent=1 // pred_fallthru
      _
    // Predicated region
    $region46: #{tpu_custom_call.1} parent=1 // pred_check
      _
    $region47: #{tpu_custom_call.1} parent=1 // pred_check_branch
      %2543 = sbr.rel (0) target = $region49
    $region48: #{tpu_custom_call.1} parent=1 // pred_region
      %2544 = dma.done [#allocation5], 32
    $region49: #{tpu_custom_call.1} parent=1 // pred_fallthru
      _
    %2545 = vsyncpa [#allocation4], 1
    %2546 = vsyncpa [#allocation5], 1

</llo_original>
